<compile_context>
chip_gen: v5e
topology: v5e:2x2
jax: 0.10.0
libtpu: 0.0.40
codegen_flags: <defaults>
</compile_context>

<pallas_src>
import functools

import jax
import jax.numpy as jnp
from jax.experimental import pallas as pl
from jax.experimental.pallas import tpu as pltpu

EPS = 1e-5


# --------------------------- fused Bottleneck kernel --------------------------

def _win(ref, y0, x0, ny, nx, stride):
    """(ny, nx, C) window of a (R, Wp, C) VMEM ref starting at (y0, x0) with `stride`."""
    if stride == 1:
        return ref[y0:y0 + ny, x0:x0 + nx, :]
    return ref[pl.ds(y0, ny, stride=stride), pl.ds(x0, nx, stride=stride), :]


def _bottleneck_kernel(*args, stride, TH, H, W, Wo, has_ds, cdt):
    # refs: [x_main, x_top_halo, (x_bot_halo if stride==1),
    #        w1, s1, b1, w2, s2, b2, w3, s3, b3, (wd, sd, bd if has_ds),
    #        out, hs_band_scratch]
    it = iter(args)
    xm_ref = next(it)                                  # (1, TH*stride, W, Cin)
    xt_ref = next(it)                                  # (1, 1, W, Cin) clamped top-halo row
    xb_ref = next(it) if stride == 1 else None         # (1, 1, W, Cin) clamped bottom-halo row
    w1_ref, s1_ref, b1_ref = next(it), next(it), next(it)
    w2_ref, s2_ref, b2_ref = next(it), next(it), next(it)   # w2: (3, 3*n_mid, n_mid)
    w3_ref, s3_ref, b3_ref = next(it), next(it), next(it)
    if has_ds:
        wd_ref, sd_ref, bd_ref = next(it), next(it), next(it)
    o_ref = next(it)                                   # (1, TH, Wo, Cexp)
    hs_ref = next(it)                                  # VMEM (RB, W+2, n_mid) in compute dtype

    MS = TH * stride                                   # main-band rows
    RB = (TH - 1) * stride + 3                         # padded band rows
    Wp = W + 2
    n_mid = w2_ref.shape[2]
    i = pl.program_id(1)
    nt = pl.num_programs(1)

    def conv1_bn_relu(xv):
        # 1x1 conv as a flattened (rows*W, Cin) x (Cin, n_mid) MXU matmul; f32 epilogue.
        h = jnp.einsum('hwc,cd->hwd', xv.astype(cdt), w1_ref[...],
                       preferred_element_type=jnp.float32)
        return jnp.maximum(h * s1_ref[...] + b1_ref[...], 0.0).astype(hs_ref.dtype)

    # --- conv1 straight from the input refs into the padded hs band (no band copy, no mask)
    zero_col = jnp.zeros((RB, 1, n_mid), hs_ref.dtype)
    zero_row = jnp.zeros((1, Wp, n_mid), hs_ref.dtype)
    hs_ref[:, 0:1, :] = zero_col                       # left  zero-padding column
    hs_ref[:, Wp - 1:Wp, :] = zero_col                 # right zero-padding column

    xmv = xm_ref[0]                                    # (MS, W, Cin) - reused by the residual
    hs_ref[1:1 + MS, 1:1 + W, :] = conv1_bn_relu(xmv)  # interior rows (always real data)

    @pl.when(i > 0)                                    # top halo row: real data except band 0
    def _():
        hs_ref[0:1, 1:1 + W, :] = conv1_bn_relu(xt_ref[0])

    @pl.when(i == 0)                                   # top zero-padding row of the image
    def _():
        hs_ref[0:1, :, :] = zero_row

    if stride == 1:
        @pl.when(i < nt - 1)                           # bottom halo row: real data except last
        def _():
            hs_ref[RB - 1:RB, 1:1 + W, :] = conv1_bn_relu(xb_ref[0])

        @pl.when(i == nt - 1)                          # bottom zero-padding row of the image
        def _():
            hs_ref[RB - 1:RB, :, :] = zero_row
    elif H % 2 == 1:
        # stride=2, odd H: the band's last row is the bottom zero-padding row on the last tile.
        @pl.when(i == nt - 1)
        def _():
            hs_ref[RB - 1:RB, :, :] = zero_row

    # --- conv2 (3x3, stride) + bn2 + relu: 3 MXU matmuls with K = 3*n_mid (dx taps fused)
    acc = jnp.zeros((TH, Wo, n_mid), jnp.float32)
    for dy in range(3):
        patch = jnp.concatenate(
            [_win(hs_ref, dy, 0, TH, Wo, stride),
             _win(hs_ref, dy, 1, TH, Wo, stride),
             _win(hs_ref, dy, 2, TH, Wo, stride)], axis=-1)   # (TH, Wo, 3*n_mid)
        acc = acc + jnp.einsum('hwc,cd->hwd', patch, w2_ref[dy],
                               preferred_element_type=jnp.float32)
    h2 = jnp.maximum(acc * s2_ref[...] + b2_ref[...], 0.0)

    # --- conv3 (1x1) + bn3
    y = jnp.einsum('hwc,cd->hwd', h2.astype(cdt), w3_ref[...],
                   preferred_element_type=jnp.float32)
    y = y * s3_ref[...] + b3_ref[...]                         # (TH, Wo, Cexp)

    # --- residual: identity or fused (1x1, stride) downsample + bn; then add + relu
    if stride == 1:
        xres = xmv                                            # (TH, Wo, Cin), Wo == W
    else:
        xres = xm_ref[0, pl.ds(0, TH, stride=stride), pl.ds(0, Wo, stride=stride), :]
    if has_ds:
        res = jnp.einsum('hwc,cd->hwd', xres.astype(cdt), wd_ref[...],
                         preferred_element_type=jnp.float32)
        res = res * sd_ref[...] + bd_ref[...]
    else:
        res = xres.astype(jnp.float32)

    o_ref[0] = jnp.maximum(y + res, 0.0).astype(o_ref.dtype)


# --------------------------- wrapper -------------------------------------------

def _bn_fold(g, b, m, v):
    s = g / jnp.sqrt(v + EPS)
    return s.reshape(1, -1), (b - m * s).reshape(1, -1)


def _const_spec(block_shape):
    """BlockSpec for a per-step-constant operand: single-buffered (no redundant VMEM copy)."""
    zeros = (0,) * len(block_shape)
    imap = lambda n, i: zeros
    try:
        return pl.BlockSpec(block_shape, imap, pipeline_mode=pl.Buffered(1))
    except Exception:   # older jax without pipeline_mode / Buffered -> default buffering
        return pl.BlockSpec(block_shape, imap)


def _vmem_budget_bytes():
    """~75% of physical VMEM (v5e/v6e: 128 MiB, v7x: 64 MiB); conservative fallback."""
    try:
        cap = int(pltpu.get_tpu_info().vmem_capacity_bytes)
    except Exception:
        cap = 64 * 1024 * 1024
    return (cap * 3) // 4


def _vmem_step_bytes(TH, *, stride, W, Wo, Cin, n_mid, Cexp, x_bytes, out_bytes,
                     cdt_bytes, has_ds):
    """Rough per-step VMEM footprint: 2x I/O bands + hs scratch + weights + SSA temporaries."""
    RB = (TH - 1) * stride + 3
    Wp = W + 2
    band_in = (TH * stride + 2) * W * Cin * x_bytes
    band_out = TH * Wo * Cexp * out_bytes
    hs = RB * Wp * n_mid * cdt_bytes
    weights = (Cin * n_mid + 9 * n_mid * n_mid + n_mid * Cexp
               + (Cin * Cexp if has_ds else 0)) * cdt_bytes \
        + 2 * (3 * n_mid + (2 if has_ds else 1) * Cexp) * 4
    tmp = (4 * TH * stride * W * n_mid                          # conv1 f32 output
           + (cdt_bytes + 4) * TH * Wo * 3 * n_mid              # conv2 patch + partials
           + 4 * TH * Wo * (2 * n_mid + 3 * Cexp))              # acc/h2, conv3/residual/add
    return 2 * (band_in + band_out) + hs + weights + tmp


def _pick_th(Ho, N, fits):
    """Largest output-row tile that fits the VMEM budget; prefer >=4 (then >=2) programs."""
    divs = [d for d in range(Ho, 0, -1) if Ho % d == 0]
    for min_progs in (4, 2, 1):
        for th in divs:
            if N * (Ho // th) >= min_progs and fits(th):
                return th
    return 1


def bottleneck_forward_nhwc(x, params, *, stride=1, compute_dtype=jnp.bfloat16):
    if stride not in (1, 2):
        raise NotImplementedError("Bottleneck Pallas kernel supports stride 1 or 2")
    N, H, W, Cin = x.shape
    n_mid = params['w1'].shape[1]
    Cexp = params['w3'].shape[1]
    Ho = (H + 2 - 3) // stride + 1
    Wo = (W + 2 - 3) // stride + 1
    has_ds = params.get('wd', None) is not None
    if not has_ds:
        assert Cin == Cexp, "identity residual requires n_in == n_out * expansion"

    cdt = compute_dtype
    x_bytes = jnp.dtype(x.dtype).itemsize
    cdt_bytes = jnp.dtype(cdt).itemsize
    out_bytes = x_bytes

    budget = int(_vmem_budget_bytes())
    fits = lambda th: _vmem_step_bytes(
        th, stride=stride, W=W, Wo=Wo, Cin=Cin, n_mid=n_mid, Cexp=Cexp,
        x_bytes=x_bytes, out_bytes=out_bytes, cdt_bytes=cdt_bytes, has_ds=has_ds) <= budget
    TH = _pick_th(Ho, N, fits)
    RB = (TH - 1) * stride + 3
    MS = TH * stride
    n_tiles = Ho // TH

    s1, b1 = _bn_fold(*params['bn1'])
    s2, b2 = _bn_fold(*params['bn2'])
    s3, b3 = _bn_fold(*params['bn3'])
    w1 = params['w1'].astype(cdt)
    # fuse the dx taps into the contraction: (kh, kw, Cin, Cout) -> (3, 3*n_mid, n_mid)
    w2 = params['w2'].reshape(3, 3 * n_mid, n_mid).astype(cdt)
    w3 = params['w3'].astype(cdt)

    # main row band + clamped single-row halo fetches (x is read from HBM once, no pre-pad)
    in_specs = [
        pl.BlockSpec((1, MS, W, Cin), lambda n, i: (n, i, 0, 0)),
        pl.BlockSpec((1, 1, W, Cin),
                     lambda n, i: (n, jnp.maximum(i * MS - 1, 0), 0, 0)),
    ]
    args = [x, x]
    if stride == 1:
        in_specs.append(
            pl.BlockSpec((1, 1, W, Cin),
                         lambda n, i: (n, jnp.minimum((i + 1) * TH, H - 1), 0, 0)))
        args.append(x)

    in_specs += [
        _const_spec((Cin, n_mid)), _const_spec((1, n_mid)), _const_spec((1, n_mid)),
        _const_spec((3, 3 * n_mid, n_mid)), _const_spec((1, n_mid)), _const_spec((1, n_mid)),
        _const_spec((n_mid, Cexp)), _const_spec((1, Cexp)), _const_spec((1, Cexp)),
    ]
    args += [w1, s1, b1, w2, s2, b2, w3, s3, b3]

    if has_ds:
        sd, bd = _bn_fold(*params['bnd'])
        wd = params['wd'].astype(cdt)
        in_specs += [_const_spec((Cin, Cexp)), _const_spec((1, Cexp)), _const_spec((1, Cexp))]
        args += [wd, sd, bd]

    kernel = functools.partial(_bottleneck_kernel, stride=stride, TH=TH,
                               H=H, W=W, Wo=Wo, has_ds=has_ds, cdt=cdt)

    return pl.pallas_call(
        kernel,
        out_shape=jax.ShapeDtypeStruct((N, Ho, Wo, Cexp), x.dtype),
        grid_spec=pltpu.PrefetchScalarGridSpec(
            num_scalar_prefetch=0,
            grid=(N, n_tiles),
            in_specs=in_specs,
            out_specs=pl.BlockSpec((1, TH, Wo, Cexp), lambda n, i: (n, i, 0, 0)),
            scratch_shapes=[pltpu.VMEM((RB, W + 2, n_mid), cdt)],
        ),
        compiler_params=pltpu.CompilerParams(
            dimension_semantics=("parallel", "parallel"),
            vmem_limit_bytes=budget),
    )(*args)


def bottleneck_forward(x_nchw, params, *, stride=1, compute_dtype=jnp.bfloat16):
    # NCHW interface to match the PyTorch module; in a full network keep NHWC across blocks
    # (bottleneck_forward_nhwc) and transpose once at the ends.
    x = jnp.transpose(x_nchw, (0, 2, 3, 1))
    out = bottleneck_forward_nhwc(x, params, stride=stride, compute_dtype=compute_dtype)
    return jnp.transpose(out, (0, 3, 1, 2))


# --------------------------- parameter init / reference -----------------------

def init_params(key, n_in, n_out, stride, expansion=4):
    Cexp = n_out * expansion
    ks = jax.random.split(key, 8)

    def bn_params(k, c):
        k1, k2, k3, k4 = jax.random.split(k, 4)
        gamma = jax.random.uniform(k1, (c,), minval=0.5, maxval=1.5)
        beta = 0.1 * jax.random.normal(k2, (c,))
        mean = 0.1 * jax.random.normal(k3, (c,))
        var = jax.random.uniform(k4, (c,), minval=0.5, maxval=1.5)
        return (gamma, beta, mean, var)

    w1 = 0.2 * jax.random.normal(ks[0], (n_out, n_in, 1, 1))      # OIHW
    w2 = 0.2 * jax.random.normal(ks[1], (n_out, n_out, 3, 3))
    w3 = 0.2 * jax.random.normal(ks[2], (Cexp, n_out, 1, 1))

    p = dict(
        w1=w1.reshape(n_out, n_in).T,                # (Cin, Cout)
        w2=jnp.transpose(w2, (2, 3, 1, 0)),          # (kh, kw, Cin, Cout)
        w3=w3.reshape(Cexp, n_out).T,
        bn1=bn_params(ks[3], n_out),
        bn2=bn_params(ks[4], n_out),
        bn3=bn_params(ks[5], Cexp),
        w1_oihw=w1, w2_oihw=w2, w3_oihw=w3,
        wd=None,
    )
    if stride != 1 or n_in != Cexp:
        wd = 0.2 * jax.random.normal(ks[6], (Cexp, n_in, 1, 1))
        p['wd'] = wd.reshape(Cexp, n_in).T
        p['bnd'] = bn_params(ks[7], Cexp)
        p['wd_oihw'] = wd
    return p


def reference_nchw(x, p, stride):
    def conv(x, w, s=1, pad=0):
        return jax.lax.conv_general_dilated(
            x, w, (s, s), [(pad, pad), (pad, pad)],
            dimension_numbers=('NCHW', 'OIHW', 'NCHW'))

    def bn(x, prm):
        g, b, m, v = prm
        sh = lambda a: a[None, :, None, None]
        return (x - sh(m)) / jnp.sqrt(sh(v) + EPS) * sh(g) + sh(b)

    out = jax.nn.relu(bn(conv(x, p['w1_oihw']), p['bn1']))
    out = jax.nn.relu(bn(conv(out, p['w2_oihw'], s=stride, pad=1), p['bn2']))
    out = bn(conv(out, p['w3_oihw']), p['bn3'])
    if p['wd'] is not None:
        res = bn(conv(x, p['wd_oihw'], s=stride), p['bnd'])
    else:
        res = x
    return jax.nn.relu(out + res)


# --------------------------- main ---------------------------------------------

if __name__ == "__main__":
    key = jax.random.PRNGKey(0)

    def run_case(idx, *, N, n_in, H, W, n_out, stride, expansion=4,
                 compute_dtype=None, atol=2e-3, rtol=2e-3):
        kx, kp = jax.random.split(jax.random.fold_in(key, idx))
        x = jax.random.normal(kx, (N, n_in, H, W), dtype=jnp.float32)
        params = init_params(kp, n_in, n_out, stride, expansion)

        kwargs = {} if compute_dtype is None else dict(compute_dtype=compute_dtype)
        out = bottleneck_forward(x, params, stride=stride, **kwargs)
        out = jax.block_until_ready(out)

        ref = reference_nchw(x, params, stride)
        Ho = (H + 2 - 3) // stride + 1
        Wo = (W + 2 - 3) // stride + 1
        assert out.shape == ref.shape == (N, n_out * expansion, Ho, Wo), (out.shape, ref.shape)
        err = float(jnp.max(jnp.abs(out - ref)))
        assert jnp.allclose(out, ref, atol=atol, rtol=rtol), (idx, err)

    # stride=1 with downsample branch (n_in != n_out*expansion), f32 MXU path
    run_case(0, N=2, n_in=4, H=16, W=16, n_out=4, stride=1, compute_dtype=jnp.float32)
    # stride=1 identity-residual branch (n_in == n_out*expansion), f32 MXU path
    run_case(1, N=2, n_in=16, H=16, W=16, n_out=4, stride=1, compute_dtype=jnp.float32)
    # default compute dtype = bf16 MXU inputs, f32 accumulate/epilogue; loose tolerance
    run_case(2, N=2, n_in=4, H=16, W=16, n_out=4, stride=1, atol=1e-1, rtol=1e-1)
    # multi-band case (interior bands use both top and bottom halo conv1 rows), f32 path
    run_case(3, N=1, n_in=4, H=24, W=16, n_out=4, stride=1, compute_dtype=jnp.float32)
    # TODO(synk): stride=2 path (strided window loads) is implemented but not exercised here;
    #             it needs a hardware test (incl. odd H) before being relied upon.

    print("KERNEL_OK")
</pallas_src>

<mosaic_0001>
module attributes {stable_mosaic.version = 11 : i64} {
  func.func @_bottleneck_kernel(%arg0: i32, %arg1: i32, %arg2: memref<1x8x16x4xf32, #tpu.memory_space<vmem>>, %arg3: memref<1x1x16x4xf32, #tpu.memory_space<vmem>>, %arg4: memref<1x1x16x4xf32, #tpu.memory_space<vmem>>, %arg5: memref<4x4xf32, #tpu.memory_space<vmem>>, %arg6: memref<1x4xf32, #tpu.memory_space<vmem>>, %arg7: memref<1x4xf32, #tpu.memory_space<vmem>>, %arg8: memref<3x12x4xf32, #tpu.memory_space<vmem>>, %arg9: memref<1x4xf32, #tpu.memory_space<vmem>>, %arg10: memref<1x4xf32, #tpu.memory_space<vmem>>, %arg11: memref<4x16xf32, #tpu.memory_space<vmem>>, %arg12: memref<1x16xf32, #tpu.memory_space<vmem>>, %arg13: memref<1x16xf32, #tpu.memory_space<vmem>>, %arg14: memref<4x16xf32, #tpu.memory_space<vmem>>, %arg15: memref<1x16xf32, #tpu.memory_space<vmem>>, %arg16: memref<1x16xf32, #tpu.memory_space<vmem>>, %arg17: memref<1x8x16x16xf32, #tpu.memory_space<vmem>>, %arg18: memref<10x18x4xf32, #tpu.memory_space<vmem>>) attributes {dimension_semantics = [#tpu.dimension_semantics<parallel>, #tpu.dimension_semantics<parallel>], iteration_bounds = array<i64: 2, 2>, scalar_prefetch = 0 : i64, scratch_operands = 1 : i64, tpu.core_type = #tpu.core_type<tc>, window_params = [{transform_indices = @transform_0, window_bounds = array<i64: 1, 8, 16, 4>}, {transform_indices = @transform_1, window_bounds = array<i64: 1, 1, 16, 4>}, {transform_indices = @transform_2, window_bounds = array<i64: 1, 1, 16, 4>}, {pipeline_mode = #tpu.pipeline_mode<synchronous>, transform_indices = @transform_3, window_bounds = array<i64: 4, 4>}, {pipeline_mode = #tpu.pipeline_mode<synchronous>, transform_indices = @transform_4, window_bounds = array<i64: 1, 4>}, {pipeline_mode = #tpu.pipeline_mode<synchronous>, transform_indices = @transform_5, window_bounds = array<i64: 1, 4>}, {pipeline_mode = #tpu.pipeline_mode<synchronous>, transform_indices = @transform_6, window_bounds = array<i64: 3, 12, 4>}, {pipeline_mode = #tpu.pipeline_mode<synchronous>, transform_indices = @transform_7, window_bounds = array<i64: 1, 4>}, {pipeline_mode = #tpu.pipeline_mode<synchronous>, transform_indices = @transform_8, window_bounds = array<i64: 1, 4>}, {pipeline_mode = #tpu.pipeline_mode<synchronous>, transform_indices = @transform_9, window_bounds = array<i64: 4, 16>}, {pipeline_mode = #tpu.pipeline_mode<synchronous>, transform_indices = @transform_10, window_bounds = array<i64: 1, 16>}, {pipeline_mode = #tpu.pipeline_mode<synchronous>, transform_indices = @transform_11, window_bounds = array<i64: 1, 16>}, {pipeline_mode = #tpu.pipeline_mode<synchronous>, transform_indices = @transform_12, window_bounds = array<i64: 4, 16>}, {pipeline_mode = #tpu.pipeline_mode<synchronous>, transform_indices = @transform_13, window_bounds = array<i64: 1, 16>}, {pipeline_mode = #tpu.pipeline_mode<synchronous>, transform_indices = @transform_14, window_bounds = array<i64: 1, 16>}, {transform_indices = @transform_15, window_bounds = array<i64: 1, 8, 16, 16>}]} {
    %cst = arith.constant 0.000000e+00 : f32
    %0 = vector.broadcast %cst : f32 to vector<10x1x4xf32>
    %cst_0 = arith.constant 0.000000e+00 : f32
    %1 = vector.broadcast %cst_0 : f32 to vector<1x18x4xf32>
    %c0 = arith.constant 0 : index
    %c0_1 = arith.constant 0 : index
    %c0_2 = arith.constant 0 : index
    %2 = vector.load %arg18[%c0, %c0_1, %c0_2] : memref<10x18x4xf32, #tpu.memory_space<vmem>>, vector<10x1x4xf32>
    tpu.vector_store %arg18[%c0, %c0_1, %c0_2], %0 {strides = array<i32>} : memref<10x18x4xf32, #tpu.memory_space<vmem>>, vector<10x1x4xf32>,
    %c0_3 = arith.constant 0 : index
    %c17 = arith.constant 17 : index
    %c0_4 = arith.constant 0 : index
    %3 = vector.load %arg18[%c0_3, %c17, %c0_4] : memref<10x18x4xf32, #tpu.memory_space<vmem>>, vector<10x1x4xf32>
    tpu.vector_store %arg18[%c0_3, %c17, %c0_4], %0 {strides = array<i32>} : memref<10x18x4xf32, #tpu.memory_space<vmem>>, vector<10x1x4xf32>,
    %c0_5 = arith.constant 0 : index
    %c0_6 = arith.constant 0 : index
    %c0_7 = arith.constant 0 : index
    %c0_8 = arith.constant 0 : index
    %4 = vector.load %arg2[%c0_5, %c0_6, %c0_7, %c0_8] : memref<1x8x16x4xf32, #tpu.memory_space<vmem>>, vector<1x8x16x4xf32>
    %5 = vector.shape_cast %4 : vector<1x8x16x4xf32> to vector<8x16x4xf32>
    %c0_9 = arith.constant 0 : index
    %c0_10 = arith.constant 0 : index
    %6 = vector.load %arg5[%c0_9, %c0_10] : memref<4x4xf32, #tpu.memory_space<vmem>>, vector<4x4xf32>
    "tpu.trace_start"() <{level = 10 : i32, message = "hwc,cd->hwd"}> : () -> ()
    %cst_11 = arith.constant dense<0.000000e+00> : vector<8x16x4xf32>
    %7 = tpu.matmul %5, %6, %cst_11 {dimension_numbers = #tpu.dot_dimension_numbers<[2], [0], [0, 1], [1], [0, 0, 0, 1, 1, 1], [], []>} : vector<8x16x4xf32>, vector<4x4xf32>, vector<8x16x4xf32> -> vector<8x16x4xf32>
    "tpu.trace_stop"() : () -> ()
    %c0_12 = arith.constant 0 : index
    %c0_13 = arith.constant 0 : index
    %8 = vector.load %arg6[%c0_12, %c0_13] : memref<1x4xf32, #tpu.memory_space<vmem>>, vector<1x4xf32>
    %9 = vector.shape_cast %8 : vector<1x4xf32> to vector<1x1x4xf32>
    %10 = vector.broadcast %9 : vector<1x1x4xf32> to vector<8x16x4xf32>
    %11 = arith.mulf %7, %10 : vector<8x16x4xf32>
    %c0_14 = arith.constant 0 : index
    %c0_15 = arith.constant 0 : index
    %12 = vector.load %arg7[%c0_14, %c0_15] : memref<1x4xf32, #tpu.memory_space<vmem>>, vector<1x4xf32>
    %13 = vector.shape_cast %12 : vector<1x4xf32> to vector<1x1x4xf32>
    %14 = vector.broadcast %13 : vector<1x1x4xf32> to vector<8x16x4xf32>
    %15 = arith.addf %11, %14 : vector<8x16x4xf32>
    %cst_16 = arith.constant 0.000000e+00 : f32
    %16 = vector.broadcast %cst_16 : f32 to vector<8x16x4xf32>
    %17 = arith.maximumf %15, %16 : vector<8x16x4xf32>
    %c1 = arith.constant 1 : index
    %c1_17 = arith.constant 1 : index
    %c0_18 = arith.constant 0 : index
    %18 = vector.load %arg18[%c1, %c1_17, %c0_18] : memref<10x18x4xf32, #tpu.memory_space<vmem>>, vector<8x16x4xf32>
    tpu.vector_store %arg18[%c1, %c1_17, %c0_18], %17 {strides = array<i32>} : memref<10x18x4xf32, #tpu.memory_space<vmem>>, vector<8x16x4xf32>,
    %c0_i32 = arith.constant 0 : i32
    %19 = arith.cmpi sgt, %arg1, %c0_i32 : i32
    %20 = arith.extui %19 : i1 to i32
    %c0_i32_19 = arith.constant 0 : i32
    %21 = arith.cmpi ne, %20, %c0_i32_19 : i32
    scf.if %21 {
      %c0_88 = arith.constant 0 : index
      %c0_89 = arith.constant 0 : index
      %c0_90 = arith.constant 0 : index
      %c0_91 = arith.constant 0 : index
      %92 = vector.load %arg3[%c0_88, %c0_89, %c0_90, %c0_91] : memref<1x1x16x4xf32, #tpu.memory_space<vmem>>, vector<1x1x16x4xf32>
      %93 = vector.shape_cast %92 : vector<1x1x16x4xf32> to vector<1x16x4xf32>
      %c0_92 = arith.constant 0 : index
      %c0_93 = arith.constant 0 : index
      %94 = vector.load %arg5[%c0_92, %c0_93] : memref<4x4xf32, #tpu.memory_space<vmem>>, vector<4x4xf32>
      "tpu.trace_start"() <{level = 10 : i32, message = "hwc,cd->hwd"}> : () -> ()
      %cst_94 = arith.constant dense<0.000000e+00> : vector<1x16x4xf32>
      %95 = tpu.matmul %93, %94, %cst_94 {dimension_numbers = #tpu.dot_dimension_numbers<[2], [0], [0, 1], [1], [0, 0, 0, 1, 1, 1], [], []>} : vector<1x16x4xf32>, vector<4x4xf32>, vector<1x16x4xf32> -> vector<1x16x4xf32>
      "tpu.trace_stop"() : () -> ()
      %c0_95 = arith.constant 0 : index
      %c0_96 = arith.constant 0 : index
      %96 = vector.load %arg6[%c0_95, %c0_96] : memref<1x4xf32, #tpu.memory_space<vmem>>, vector<1x4xf32>
      %97 = vector.shape_cast %96 : vector<1x4xf32> to vector<1x1x4xf32>
      %98 = vector.broadcast %97 : vector<1x1x4xf32> to vector<1x16x4xf32>
      %99 = arith.mulf %95, %98 : vector<1x16x4xf32>
      %c0_97 = arith.constant 0 : index
      %c0_98 = arith.constant 0 : index
      %100 = vector.load %arg7[%c0_97, %c0_98] : memref<1x4xf32, #tpu.memory_space<vmem>>, vector<1x4xf32>
      %101 = vector.shape_cast %100 : vector<1x4xf32> to vector<1x1x4xf32>
      %102 = vector.broadcast %101 : vector<1x1x4xf32> to vector<1x16x4xf32>
      %103 = arith.addf %99, %102 : vector<1x16x4xf32>
      %cst_99 = arith.constant 0.000000e+00 : f32
      %104 = vector.broadcast %cst_99 : f32 to vector<1x16x4xf32>
      %105 = arith.maximumf %103, %104 : vector<1x16x4xf32>
      %c0_100 = arith.constant 0 : index
      %c1_101 = arith.constant 1 : index
      %c0_102 = arith.constant 0 : index
      %106 = vector.load %arg18[%c0_100, %c1_101, %c0_102] : memref<10x18x4xf32, #tpu.memory_space<vmem>>, vector<1x16x4xf32>
      tpu.vector_store %arg18[%c0_100, %c1_101, %c0_102], %105 {strides = array<i32>} : memref<10x18x4xf32, #tpu.memory_space<vmem>>, vector<1x16x4xf32>,
    } else {
    }
    %c0_i32_20 = arith.constant 0 : i32
    %22 = arith.cmpi eq, %arg1, %c0_i32_20 : i32
    %23 = arith.extui %22 : i1 to i32
    %c0_i32_21 = arith.constant 0 : i32
    %24 = arith.cmpi ne, %23, %c0_i32_21 : i32
    scf.if %24 {
      %c0_88 = arith.constant 0 : index
      %c0_89 = arith.constant 0 : index
      %c0_90 = arith.constant 0 : index
      %92 = vector.load %arg18[%c0_88, %c0_89, %c0_90] : memref<10x18x4xf32, #tpu.memory_space<vmem>>, vector<1x18x4xf32>
      tpu.vector_store %arg18[%c0_88, %c0_89, %c0_90], %1 {strides = array<i32>} : memref<10x18x4xf32, #tpu.memory_space<vmem>>, vector<1x18x4xf32>,
    } else {
    }
    %c1_i32 = arith.constant 1 : i32
    %25 = arith.cmpi slt, %arg1, %c1_i32 : i32
    %26 = arith.extui %25 : i1 to i32
    %c0_i32_22 = arith.constant 0 : i32
    %27 = arith.cmpi ne, %26, %c0_i32_22 : i32
    scf.if %27 {
      %c0_88 = arith.constant 0 : index
      %c0_89 = arith.constant 0 : index
      %c0_90 = arith.constant 0 : index
      %c0_91 = arith.constant 0 : index
      %92 = vector.load %arg4[%c0_88, %c0_89, %c0_90, %c0_91] : memref<1x1x16x4xf32, #tpu.memory_space<vmem>>, vector<1x1x16x4xf32>
      %93 = vector.shape_cast %92 : vector<1x1x16x4xf32> to vector<1x16x4xf32>
      %c0_92 = arith.constant 0 : index
      %c0_93 = arith.constant 0 : index
      %94 = vector.load %arg5[%c0_92, %c0_93] : memref<4x4xf32, #tpu.memory_space<vmem>>, vector<4x4xf32>
      "tpu.trace_start"() <{level = 10 : i32, message = "hwc,cd->hwd"}> : () -> ()
      %cst_94 = arith.constant dense<0.000000e+00> : vector<1x16x4xf32>
      %95 = tpu.matmul %93, %94, %cst_94 {dimension_numbers = #tpu.dot_dimension_numbers<[2], [0], [0, 1], [1], [0, 0, 0, 1, 1, 1], [], []>} : vector<1x16x4xf32>, vector<4x4xf32>, vector<1x16x4xf32> -> vector<1x16x4xf32>
      "tpu.trace_stop"() : () -> ()
      %c0_95 = arith.constant 0 : index
      %c0_96 = arith.constant 0 : index
      %96 = vector.load %arg6[%c0_95, %c0_96] : memref<1x4xf32, #tpu.memory_space<vmem>>, vector<1x4xf32>
      %97 = vector.shape_cast %96 : vector<1x4xf32> to vector<1x1x4xf32>
      %98 = vector.broadcast %97 : vector<1x1x4xf32> to vector<1x16x4xf32>
      %99 = arith.mulf %95, %98 : vector<1x16x4xf32>
      %c0_97 = arith.constant 0 : index
      %c0_98 = arith.constant 0 : index
      %100 = vector.load %arg7[%c0_97, %c0_98] : memref<1x4xf32, #tpu.memory_space<vmem>>, vector<1x4xf32>
      %101 = vector.shape_cast %100 : vector<1x4xf32> to vector<1x1x4xf32>
      %102 = vector.broadcast %101 : vector<1x1x4xf32> to vector<1x16x4xf32>
      %103 = arith.addf %99, %102 : vector<1x16x4xf32>
      %cst_99 = arith.constant 0.000000e+00 : f32
      %104 = vector.broadcast %cst_99 : f32 to vector<1x16x4xf32>
      %105 = arith.maximumf %103, %104 : vector<1x16x4xf32>
      %c9 = arith.constant 9 : index
      %c1_100 = arith.constant 1 : index
      %c0_101 = arith.constant 0 : index
      %106 = vector.load %arg18[%c9, %c1_100, %c0_101] : memref<10x18x4xf32, #tpu.memory_space<vmem>>, vector<1x16x4xf32>
      tpu.vector_store %arg18[%c9, %c1_100, %c0_101], %105 {strides = array<i32>} : memref<10x18x4xf32, #tpu.memory_space<vmem>>, vector<1x16x4xf32>,
    } else {
    }
    %c1_i32_23 = arith.constant 1 : i32
    %28 = arith.cmpi eq, %arg1, %c1_i32_23 : i32
    %29 = arith.extui %28 : i1 to i32
    %c0_i32_24 = arith.constant 0 : i32
    %30 = arith.cmpi ne, %29, %c0_i32_24 : i32
    scf.if %30 {
      %c9 = arith.constant 9 : index
      %c0_88 = arith.constant 0 : index
      %c0_89 = arith.constant 0 : index
      %92 = vector.load %arg18[%c9, %c0_88, %c0_89] : memref<10x18x4xf32, #tpu.memory_space<vmem>>, vector<1x18x4xf32>
      tpu.vector_store %arg18[%c9, %c0_88, %c0_89], %1 {strides = array<i32>} : memref<10x18x4xf32, #tpu.memory_space<vmem>>, vector<1x18x4xf32>,
    } else {
    }
    %cst_25 = arith.constant 0.000000e+00 : f32
    %31 = vector.broadcast %cst_25 : f32 to vector<8x16x4xf32>
    %c0_26 = arith.constant 0 : index
    %c0_27 = arith.constant 0 : index
    %c0_28 = arith.constant 0 : index
    %32 = vector.load %arg18[%c0_26, %c0_27, %c0_28] : memref<10x18x4xf32, #tpu.memory_space<vmem>>, vector<8x16x4xf32>
    %c0_29 = arith.constant 0 : index
    %c1_30 = arith.constant 1 : index
    %c0_31 = arith.constant 0 : index
    %33 = vector.load %arg18[%c0_29, %c1_30, %c0_31] : memref<10x18x4xf32, #tpu.memory_space<vmem>>, vector<8x16x4xf32>
    %c0_32 = arith.constant 0 : index
    %c2 = arith.constant 2 : index
    %c0_33 = arith.constant 0 : index
    %34 = vector.load %arg18[%c0_32, %c2, %c0_33] : memref<10x18x4xf32, #tpu.memory_space<vmem>>, vector<8x16x4xf32>
    %35 = tpu.concatenate %32, %33, %34 in 2 : vector<8x16x4xf32>, vector<8x16x4xf32>, vector<8x16x4xf32> -> vector<8x16x12xf32>
    %c0_34 = arith.constant 0 : index
    %c0_35 = arith.constant 0 : index
    %c0_36 = arith.constant 0 : index
    %36 = vector.load %arg8[%c0_34, %c0_35, %c0_36] : memref<3x12x4xf32, #tpu.memory_space<vmem>>, vector<1x12x4xf32>
    %37 = vector.shape_cast %36 : vector<1x12x4xf32> to vector<12x4xf32>
    "tpu.trace_start"() <{level = 10 : i32, message = "hwc,cd->hwd"}> : () -> ()
    %cst_37 = arith.constant dense<0.000000e+00> : vector<8x16x4xf32>
    %38 = tpu.matmul %35, %37, %cst_37 {dimension_numbers = #tpu.dot_dimension_numbers<[2], [0], [0, 1], [1], [0, 0, 0, 1, 1, 1], [], []>} : vector<8x16x12xf32>, vector<12x4xf32>, vector<8x16x4xf32> -> vector<8x16x4xf32>
    "tpu.trace_stop"() : () -> ()
    %39 = arith.addf %31, %38 : vector<8x16x4xf32>
    %c1_38 = arith.constant 1 : index
    %c0_39 = arith.constant 0 : index
    %c0_40 = arith.constant 0 : index
    %40 = vector.load %arg18[%c1_38, %c0_39, %c0_40] : memref<10x18x4xf32, #tpu.memory_space<vmem>>, vector<8x16x4xf32>
    %c1_41 = arith.constant 1 : index
    %c1_42 = arith.constant 1 : index
    %c0_43 = arith.constant 0 : index
    %41 = vector.load %arg18[%c1_41, %c1_42, %c0_43] : memref<10x18x4xf32, #tpu.memory_space<vmem>>, vector<8x16x4xf32>
    %c1_44 = arith.constant 1 : index
    %c2_45 = arith.constant 2 : index
    %c0_46 = arith.constant 0 : index
    %42 = vector.load %arg18[%c1_44, %c2_45, %c0_46] : memref<10x18x4xf32, #tpu.memory_space<vmem>>, vector<8x16x4xf32>
    %43 = tpu.concatenate %40, %41, %42 in 2 : vector<8x16x4xf32>, vector<8x16x4xf32>, vector<8x16x4xf32> -> vector<8x16x12xf32>
    %c1_47 = arith.constant 1 : index
    %c0_48 = arith.constant 0 : index
    %c0_49 = arith.constant 0 : index
    %44 = vector.load %arg8[%c1_47, %c0_48, %c0_49] : memref<3x12x4xf32, #tpu.memory_space<vmem>>, vector<1x12x4xf32>
    %45 = vector.shape_cast %44 : vector<1x12x4xf32> to vector<12x4xf32>
    "tpu.trace_start"() <{level = 10 : i32, message = "hwc,cd->hwd"}> : () -> ()
    %cst_50 = arith.constant dense<0.000000e+00> : vector<8x16x4xf32>
    %46 = tpu.matmul %43, %45, %cst_50 {dimension_numbers = #tpu.dot_dimension_numbers<[2], [0], [0, 1], [1], [0, 0, 0, 1, 1, 1], [], []>} : vector<8x16x12xf32>, vector<12x4xf32>, vector<8x16x4xf32> -> vector<8x16x4xf32>
    "tpu.trace_stop"() : () -> ()
    %47 = arith.addf %39, %46 : vector<8x16x4xf32>
    %c2_51 = arith.constant 2 : index
    %c0_52 = arith.constant 0 : index
    %c0_53 = arith.constant 0 : index
    %48 = vector.load %arg18[%c2_51, %c0_52, %c0_53] : memref<10x18x4xf32, #tpu.memory_space<vmem>>, vector<8x16x4xf32>
    %c2_54 = arith.constant 2 : index
    %c1_55 = arith.constant 1 : index
    %c0_56 = arith.constant 0 : index
    %49 = vector.load %arg18[%c2_54, %c1_55, %c0_56] : memref<10x18x4xf32, #tpu.memory_space<vmem>>, vector<8x16x4xf32>
    %c2_57 = arith.constant 2 : index
    %c2_58 = arith.constant 2 : index
    %c0_59 = arith.constant 0 : index
    %50 = vector.load %arg18[%c2_57, %c2_58, %c0_59] : memref<10x18x4xf32, #tpu.memory_space<vmem>>, vector<8x16x4xf32>
    %51 = tpu.concatenate %48, %49, %50 in 2 : vector<8x16x4xf32>, vector<8x16x4xf32>, vector<8x16x4xf32> -> vector<8x16x12xf32>
    %c2_60 = arith.constant 2 : index
    %c0_61 = arith.constant 0 : index
    %c0_62 = arith.constant 0 : index
    %52 = vector.load %arg8[%c2_60, %c0_61, %c0_62] : memref<3x12x4xf32, #tpu.memory_space<vmem>>, vector<1x12x4xf32>
    %53 = vector.shape_cast %52 : vector<1x12x4xf32> to vector<12x4xf32>
    "tpu.trace_start"() <{level = 10 : i32, message = "hwc,cd->hwd"}> : () -> ()
    %cst_63 = arith.constant dense<0.000000e+00> : vector<8x16x4xf32>
    %54 = tpu.matmul %51, %53, %cst_63 {dimension_numbers = #tpu.dot_dimension_numbers<[2], [0], [0, 1], [1], [0, 0, 0, 1, 1, 1], [], []>} : vector<8x16x12xf32>, vector<12x4xf32>, vector<8x16x4xf32> -> vector<8x16x4xf32>
    "tpu.trace_stop"() : () -> ()
    %55 = arith.addf %47, %54 : vector<8x16x4xf32>
    %c0_64 = arith.constant 0 : index
    %c0_65 = arith.constant 0 : index
    %56 = vector.load %arg9[%c0_64, %c0_65] : memref<1x4xf32, #tpu.memory_space<vmem>>, vector<1x4xf32>
    %57 = vector.shape_cast %56 : vector<1x4xf32> to vector<1x1x4xf32>
    %58 = vector.broadcast %57 : vector<1x1x4xf32> to vector<8x16x4xf32>
    %59 = arith.mulf %55, %58 : vector<8x16x4xf32>
    %c0_66 = arith.constant 0 : index
    %c0_67 = arith.constant 0 : index
    %60 = vector.load %arg10[%c0_66, %c0_67] : memref<1x4xf32, #tpu.memory_space<vmem>>, vector<1x4xf32>
    %61 = vector.shape_cast %60 : vector<1x4xf32> to vector<1x1x4xf32>
    %62 = vector.broadcast %61 : vector<1x1x4xf32> to vector<8x16x4xf32>
    %63 = arith.addf %59, %62 : vector<8x16x4xf32>
    %cst_68 = arith.constant 0.000000e+00 : f32
    %64 = vector.broadcast %cst_68 : f32 to vector<8x16x4xf32>
    %65 = arith.maximumf %63, %64 : vector<8x16x4xf32>
    %c0_69 = arith.constant 0 : index
    %c0_70 = arith.constant 0 : index
    %66 = vector.load %arg11[%c0_69, %c0_70] : memref<4x16xf32, #tpu.memory_space<vmem>>, vector<4x16xf32>
    "tpu.trace_start"() <{level = 10 : i32, message = "hwc,cd->hwd"}> : () -> ()
    %cst_71 = arith.constant dense<0.000000e+00> : vector<8x16x16xf32>
    %67 = tpu.matmul %65, %66, %cst_71 {dimension_numbers = #tpu.dot_dimension_numbers<[2], [0], [0, 1], [1], [0, 0, 0, 1, 1, 1], [], []>} : vector<8x16x4xf32>, vector<4x16xf32>, vector<8x16x16xf32> -> vector<8x16x16xf32>
    "tpu.trace_stop"() : () -> ()
    %c0_72 = arith.constant 0 : index
    %c0_73 = arith.constant 0 : index
    %68 = vector.load %arg12[%c0_72, %c0_73] : memref<1x16xf32, #tpu.memory_space<vmem>>, vector<1x16xf32>
    %69 = vector.shape_cast %68 : vector<1x16xf32> to vector<1x1x16xf32>
    %70 = vector.broadcast %69 : vector<1x1x16xf32> to vector<8x16x16xf32>
    %71 = arith.mulf %67, %70 : vector<8x16x16xf32>
    %c0_74 = arith.constant 0 : index
    %c0_75 = arith.constant 0 : index
    %72 = vector.load %arg13[%c0_74, %c0_75] : memref<1x16xf32, #tpu.memory_space<vmem>>, vector<1x16xf32>
    %73 = vector.shape_cast %72 : vector<1x16xf32> to vector<1x1x16xf32>
    %74 = vector.broadcast %73 : vector<1x1x16xf32> to vector<8x16x16xf32>
    %75 = arith.addf %71, %74 : vector<8x16x16xf32>
    %c0_76 = arith.constant 0 : index
    %c0_77 = arith.constant 0 : index
    %76 = vector.load %arg14[%c0_76, %c0_77] : memref<4x16xf32, #tpu.memory_space<vmem>>, vector<4x16xf32>
    "tpu.trace_start"() <{level = 10 : i32, message = "hwc,cd->hwd"}> : () -> ()
    %cst_78 = arith.constant dense<0.000000e+00> : vector<8x16x16xf32>
    %77 = tpu.matmul %5, %76, %cst_78 {dimension_numbers = #tpu.dot_dimension_numbers<[2], [0], [0, 1], [1], [0, 0, 0, 1, 1, 1], [], []>} : vector<8x16x4xf32>, vector<4x16xf32>, vector<8x16x16xf32> -> vector<8x16x16xf32>
    "tpu.trace_stop"() : () -> ()
    %c0_79 = arith.constant 0 : index
    %c0_80 = arith.constant 0 : index
    %78 = vector.load %arg15[%c0_79, %c0_80] : memref<1x16xf32, #tpu.memory_space<vmem>>, vector<1x16xf32>
    %79 = vector.shape_cast %78 : vector<1x16xf32> to vector<1x1x16xf32>
    %80 = vector.broadcast %79 : vector<1x1x16xf32> to vector<8x16x16xf32>
    %81 = arith.mulf %77, %80 : vector<8x16x16xf32>
    %c0_81 = arith.constant 0 : index
    %c0_82 = arith.constant 0 : index
    %82 = vector.load %arg16[%c0_81, %c0_82] : memref<1x16xf32, #tpu.memory_space<vmem>>, vector<1x16xf32>
    %83 = vector.shape_cast %82 : vector<1x16xf32> to vector<1x1x16xf32>
    %84 = vector.broadcast %83 : vector<1x1x16xf32> to vector<8x16x16xf32>
    %85 = arith.addf %81, %84 : vector<8x16x16xf32>
    %86 = arith.addf %75, %85 : vector<8x16x16xf32>
    %cst_83 = arith.constant 0.000000e+00 : f32
    %87 = vector.broadcast %cst_83 : f32 to vector<8x16x16xf32>
    %88 = arith.maximumf %86, %87 : vector<8x16x16xf32>
    %c0_84 = arith.constant 0 : index
    %c0_85 = arith.constant 0 : index
    %c0_86 = arith.constant 0 : index
    %c0_87 = arith.constant 0 : index
    %89 = vector.load %arg17[%c0_84, %c0_85, %c0_86, %c0_87] : memref<1x8x16x16xf32, #tpu.memory_space<vmem>>, vector<1x8x16x16xf32>
    %90 = vector.shape_cast %89 : vector<1x8x16x16xf32> to vector<8x16x16xf32>
    %91 = vector.shape_cast %88 : vector<8x16x16xf32> to vector<1x8x16x16xf32>
    tpu.vector_store %arg17[%c0_84, %c0_85, %c0_86, %c0_87], %91 {strides = array<i32>} : memref<1x8x16x16xf32, #tpu.memory_space<vmem>>, vector<1x8x16x16xf32>,
    return
  }
  func.func @transform_0(%arg0: i32, %arg1: i32) -> (i32, i32, i32, i32) {
    %c0_i32 = arith.constant 0 : i32
    %c0_i32_0 = arith.constant 0 : i32
    %c0_i32_1 = arith.constant 0 : i32
    return %arg0, %arg1, %c0_i32, %c0_i32_0 : i32, i32, i32, i32
  }
  func.func @transform_1(%arg0: i32, %arg1: i32) -> (i32, i32, i32, i32) {
    %c8_i32 = arith.constant 8 : i32
    %0 = arith.muli %arg1, %c8_i32 : i32
    %c1_i32 = arith.constant 1 : i32
    %1 = arith.subi %0, %c1_i32 : i32
    %c0_i32 = arith.constant 0 : i32
    %2 = arith.maxsi %1, %c0_i32 : i32
    %c0_i32_0 = arith.constant 0 : i32
    %c0_i32_1 = arith.constant 0 : i32
    %c0_i32_2 = arith.constant 0 : i32
    return %arg0, %2, %c0_i32_0, %c0_i32_1 : i32, i32, i32, i32
  }
  func.func @transform_2(%arg0: i32, %arg1: i32) -> (i32, i32, i32, i32) {
    %c1_i32 = arith.constant 1 : i32
    %0 = arith.addi %arg1, %c1_i32 : i32
    %c8_i32 = arith.constant 8 : i32
    %1 = arith.muli %0, %c8_i32 : i32
    %c15_i32 = arith.constant 15 : i32
    %2 = arith.minsi %1, %c15_i32 : i32
    %c0_i32 = arith.constant 0 : i32
    %c0_i32_0 = arith.constant 0 : i32
    %c0_i32_1 = arith.constant 0 : i32
    return %arg0, %2, %c0_i32, %c0_i32_0 : i32, i32, i32, i32
  }
  func.func @transform_3(%arg0: i32, %arg1: i32) -> (i32, i32) {
    %c0_i32 = arith.constant 0 : i32
    %c0_i32_0 = arith.constant 0 : i32
    %c0_i32_1 = arith.constant 0 : i32
    return %c0_i32, %c0_i32_0 : i32, i32
  }
  func.func @transform_4(%arg0: i32, %arg1: i32) -> (i32, i32) {
    %c0_i32 = arith.constant 0 : i32
    %c0_i32_0 = arith.constant 0 : i32
    %c0_i32_1 = arith.constant 0 : i32
    return %c0_i32, %c0_i32_0 : i32, i32
  }
  func.func @transform_5(%arg0: i32, %arg1: i32) -> (i32, i32) {
    %c0_i32 = arith.constant 0 : i32
    %c0_i32_0 = arith.constant 0 : i32
    %c0_i32_1 = arith.constant 0 : i32
    return %c0_i32, %c0_i32_0 : i32, i32
  }
  func.func @transform_6(%arg0: i32, %arg1: i32) -> (i32, i32, i32) {
    %c0_i32 = arith.constant 0 : i32
    %c0_i32_0 = arith.constant 0 : i32
    %c0_i32_1 = arith.constant 0 : i32
    %c0_i32_2 = arith.constant 0 : i32
    return %c0_i32, %c0_i32_0, %c0_i32_1 : i32, i32, i32
  }
  func.func @transform_7(%arg0: i32, %arg1: i32) -> (i32, i32) {
    %c0_i32 = arith.constant 0 : i32
    %c0_i32_0 = arith.constant 0 : i32
    %c0_i32_1 = arith.constant 0 : i32
    return %c0_i32, %c0_i32_0 : i32, i32
  }
  func.func @transform_8(%arg0: i32, %arg1: i32) -> (i32, i32) {
    %c0_i32 = arith.constant 0 : i32
    %c0_i32_0 = arith.constant 0 : i32
    %c0_i32_1 = arith.constant 0 : i32
    return %c0_i32, %c0_i32_0 : i32, i32
  }
  func.func @transform_9(%arg0: i32, %arg1: i32) -> (i32, i32) {
    %c0_i32 = arith.constant 0 : i32
    %c0_i32_0 = arith.constant 0 : i32
    %c0_i32_1 = arith.constant 0 : i32
    return %c0_i32, %c0_i32_0 : i32, i32
  }
  func.func @transform_10(%arg0: i32, %arg1: i32) -> (i32, i32) {
    %c0_i32 = arith.constant 0 : i32
    %c0_i32_0 = arith.constant 0 : i32
    %c0_i32_1 = arith.constant 0 : i32
    return %c0_i32, %c0_i32_0 : i32, i32
  }
  func.func @transform_11(%arg0: i32, %arg1: i32) -> (i32, i32) {
    %c0_i32 = arith.constant 0 : i32
    %c0_i32_0 = arith.constant 0 : i32
    %c0_i32_1 = arith.constant 0 : i32
    return %c0_i32, %c0_i32_0 : i32, i32
  }
  func.func @transform_12(%arg0: i32, %arg1: i32) -> (i32, i32) {
    %c0_i32 = arith.constant 0 : i32
    %c0_i32_0 = arith.constant 0 : i32
    %c0_i32_1 = arith.constant 0 : i32
    return %c0_i32, %c0_i32_0 : i32, i32
  }
  func.func @transform_13(%arg0: i32, %arg1: i32) -> (i32, i32) {
    %c0_i32 = arith.constant 0 : i32
    %c0_i32_0 = arith.constant 0 : i32
    %c0_i32_1 = arith.constant 0 : i32
    return %c0_i32, %c0_i32_0 : i32, i32
  }
  func.func @transform_14(%arg0: i32, %arg1: i32) -> (i32, i32) {
    %c0_i32 = arith.constant 0 : i32
    %c0_i32_0 = arith.constant 0 : i32
    %c0_i32_1 = arith.constant 0 : i32
    return %c0_i32, %c0_i32_0 : i32, i32
  }
  func.func @transform_15(%arg0: i32, %arg1: i32) -> (i32, i32, i32, i32) {
    %c0_i32 = arith.constant 0 : i32
    %c0_i32_0 = arith.constant 0 : i32
    %c0_i32_1 = arith.constant 0 : i32
    return %arg0, %arg1, %c0_i32, %c0_i32_0 : i32, i32, i32, i32
  }
}

</mosaic_0001>

<llo_original>
// kernel: tpu_custom_call.1
$region0: #{tpu_custom_call.1}
  #allocation0 [shape = 'u32[]', space=smem, size = 0x4, offset = 0x4, fixed_abs, tag = 'smem constant byte address 0x4 - core index']
  #allocation1 [shape = 'u32[72,128]{1,0:T(1,128)}', space=vmem, size = 0x9000, scoped, tag = 'internal scratch']
  #allocation2 [shape = 'f32[10,18,4]{2,1,0:T(8,128)}', space=vmem, size = 0x1e000, scoped, tag = 'scratch operand']
  %s0 = inlined_call_operand.vmem [shape: f32[2,16,16,4], index: 0, kind: input, shape index: {}]
  %s1 = inlined_call_operand.vmem [shape: f32[2,16,16,4], index: 1, kind: input, shape index: {}]
  %s2 = inlined_call_operand.vmem [shape: f32[2,16,16,4], index: 2, kind: input, shape index: {}]
  %s3 = inlined_call_operand.vmem [shape: f32[4,4], index: 3, kind: input, shape index: {}]
  %s4 = inlined_call_operand.vmem [shape: f32[1,4], index: 4, kind: input, shape index: {}]
  %s5 = inlined_call_operand.vmem [shape: f32[1,4], index: 5, kind: input, shape index: {}]
  %s6 = inlined_call_operand.vmem [shape: f32[3,12,4], index: 6, kind: input, shape index: {}]
  %s7 = inlined_call_operand.vmem [shape: f32[1,4], index: 7, kind: input, shape index: {}]
  %s8 = inlined_call_operand.vmem [shape: f32[1,4], index: 8, kind: input, shape index: {}]
  %s9 = inlined_call_operand.vmem [shape: f32[4,16], index: 9, kind: input, shape index: {}]
  %s10 = inlined_call_operand.vmem [shape: f32[1,16], index: 10, kind: input, shape index: {}]
  %s11 = inlined_call_operand.vmem [shape: f32[1,16], index: 11, kind: input, shape index: {}]
  %s12 = inlined_call_operand.vmem [shape: f32[4,16], index: 12, kind: input, shape index: {}]
  %s13 = inlined_call_operand.vmem [shape: f32[1,16], index: 13, kind: input, shape index: {}]
  %s14 = inlined_call_operand.vmem [shape: f32[1,16], index: 14, kind: input, shape index: {}]
  %s15 = inlined_call_operand.hbm [shape: f32[2,16,16,16], index: 15, kind: output, shape index: {}]
  %s16 = sld [smem:[#allocation0]]
  $region109: #{tpu_custom_call.1} parent=0
    _
  %s18 = ssub.s32 1, %s16
  %s19 = scalar_select 0, %s18, %s16
  $region1: #{tpu_custom_call.1} parent=0
    #allocation3 [shape = 'u8[131072]{0}', space=vmem, size = 0x20000, scoped, tag = 'output window, operand 0']
    #allocation4 [shape = 's32[2]{0}', space=sflag, size = 0x8, scoped, tag = 'scoped memory for tpu_custom_call.1']
    %20 = vsyncpa [#allocation4], 0
    %s21 = scalar_lea.sflag [#allocation4], 1
    %22 = vsyncpa %s21, 0
    loop: start=0, step=1, limit=6
    $region2: #{tpu_custom_call.1} parent=1 // loop_pre_header
      _
    $region3: #{tpu_custom_call.1} parent=1 // loop_header
      %s24 = sphi 0, %s28
      %p25 = scmp.ge.s32.totalorder %s24, 6
      %s31 = sphi 0, %s43
      %s32 = sphi 0, %s39
      %s33 = sphi 0, %s31
      %s34 = sphi 0, %s32
      %s35 = sphi 0, %s33
      %s36 = sphi 0, %s34
      %s48 = sphi 0, %s50
      %s51 = sphi 0, %s48
      %s52 = sphi 0, %s51
      %s68 = sphi 0, %s52
      %s84 = sphi 0, %s86
      %s87 = sphi 0, %s84
      %s88 = sphi 0, %s87
      %s104 = sphi 0, %s88
      %s120 = sphi 0, %s122
      %s123 = sphi 0, %s120
      %s124 = sphi 0, %s123
      %s140 = sphi 0, %s124
      %s144 = sphi 0, %s144
      %s146 = sphi 0, %s144
      %s147 = sphi 0, %s146
      %s161 = sphi 0, %s147
      %s165 = sphi 0, %s165
      %s167 = sphi 0, %s165
      %s168 = sphi 0, %s167
      %s182 = sphi 0, %s168
      %s186 = sphi 0, %s186
      %s188 = sphi 0, %s186
      %s189 = sphi 0, %s188
      %s203 = sphi 0, %s189
      %s207 = sphi 0, %s207
      %s209 = sphi 0, %s207
      %s210 = sphi 0, %s209
      %s224 = sphi 0, %s210
      %s228 = sphi 0, %s228
      %s230 = sphi 0, %s228
      %s231 = sphi 0, %s230
      %s245 = sphi 0, %s231
      %s249 = sphi 0, %s249
      %s251 = sphi 0, %s249
      %s252 = sphi 0, %s251
      %s266 = sphi 0, %s252
      %s270 = sphi 0, %s270
      %s272 = sphi 0, %s270
      %s273 = sphi 0, %s272
      %s287 = sphi 0, %s273
      %s291 = sphi 0, %s291
      %s293 = sphi 0, %s291
      %s294 = sphi 0, %s293
      %s308 = sphi 0, %s294
      %s312 = sphi 0, %s312
      %s314 = sphi 0, %s312
      %s315 = sphi 0, %s314
      %s329 = sphi 0, %s315
      %s333 = sphi 0, %s333
      %s335 = sphi 0, %s333
      %s336 = sphi 0, %s335
      %s350 = sphi 0, %s336
      %s354 = sphi 0, %s354
      %s356 = sphi 0, %s354
      %s357 = sphi 0, %s356
      %s371 = sphi 0, %s357
      %s375 = sphi 0, %s375
      %s377 = sphi 0, %s375
      %s378 = sphi 0, %s377
      %s392 = sphi 0, %s378
      %s400 = sphi 0, %s402
      %s403 = sphi 0, %s400
      %s404 = sphi 0, %s403
      %s420 = sphi 0, %s404
    $region4: #{tpu_custom_call.1} parent=1 // loop_header_branch
      %27 = sbr.rel (%p25) target = $region8
    $region5: #{tpu_custom_call.1} parent=1 // loop_body
      %s29 = ssub.s32 %s24, 1
      %s30 = ssub.s32 %s24, 2
      %s37 = sadd.s32 1, %s32
      %p38 = scmp.ge.s32.totalorder %s37, 2
      %s39 = scalar_select %p38, 0, %s37
      %s40 = sadd.s32 1, %s31
      %s41 = scalar_select %p38, %s40, %s31
      %p42 = scmp.ge.s32.totalorder %s41, 2
      %s43 = scalar_select %p42, 0, %s41
      %s44 = ssub.s32 %s31, %s43
      %s45 = ssub.s32 %s32, %s39
      %s46 = sor.u32 %s44, %s45
      %p47 = scmp.eq.s32.totalorder %s46, 0
      %s49 = sadd.s32 %s48, 1
      %s50 = scalar_select %p47, %s48, %s49
      %p53 = pneg %p47
      %p54 = scmp.eq.s32.totalorder %s24, 3
      %p55 = por %p53, %p54
      %p56 = scmp.ne.s32.totalorder %s48, %s51
      %p57 = scmp.eq.s32.totalorder %s24, 0
      %p58 = por %p56, %p57
      %p59 = scmp.ne.s32.totalorder %s48, %s51
      %p60 = scmp.eq.s32.totalorder %s29, 3
      %p61 = por %p59, %p60
      %p62 = scmp.ne.s32.totalorder %s51, %s52
      %p63 = scmp.eq.s32.totalorder %s29, 0
      %p64 = por %p62, %p63
      %p65 = scmp.ne.s32.totalorder %s51, %s52
      %p66 = scmp.eq.s32.totalorder %s30, 3
      %p67 = por %p65, %p66
      %p69 = scmp.ne.s32.totalorder %s52, %s68
      %p70 = scmp.eq.s32.totalorder %s30, 0
      %p71 = por %p69, %p70
      %s72 = smul.u32 %s32, 8
      %s73 = ssub.s32 %s72, 1
      %p74 = scmp.gt.s32.totalorder %s73, 0
      %s75 = scalar_select %p74, %s73, 0
      %s76 = smul.u32 %s39, 8
      %s77 = ssub.s32 %s76, 1
      %p78 = scmp.gt.s32.totalorder %s77, 0
      %s79 = scalar_select %p78, %s77, 0
      %s80 = ssub.s32 %s31, %s43
      %s81 = ssub.s32 %s75, %s79
      %s82 = sor.u32 %s80, %s81
      %p83 = scmp.eq.s32.totalorder %s82, 0
      %s85 = sadd.s32 %s84, 1
      %s86 = scalar_select %p83, %s84, %s85
      %p89 = pneg %p83
      %p90 = scmp.eq.s32.totalorder %s24, 3
      %p91 = por %p89, %p90
      %p92 = scmp.ne.s32.totalorder %s84, %s87
      %p93 = scmp.eq.s32.totalorder %s24, 0
      %p94 = por %p92, %p93
      %p95 = scmp.ne.s32.totalorder %s84, %s87
      %p96 = scmp.eq.s32.totalorder %s29, 3
      %p97 = por %p95, %p96
      %p98 = scmp.ne.s32.totalorder %s87, %s88
      %p99 = scmp.eq.s32.totalorder %s29, 0
      %p100 = por %p98, %p99
      %p101 = scmp.ne.s32.totalorder %s87, %s88
      %p102 = scmp.eq.s32.totalorder %s30, 3
      %p103 = por %p101, %p102
      %p105 = scmp.ne.s32.totalorder %s88, %s104
      %p106 = scmp.eq.s32.totalorder %s30, 0
      %p107 = por %p105, %p106
      %s108 = sadd.s32 %s32, 1
      %s109 = smul.u32 %s108, 8
      %p110 = scmp.lt.s32.totalorder %s109, 15
      %s111 = scalar_select %p110, %s109, 15
      %s112 = sadd.s32 %s39, 1
      %s113 = smul.u32 %s112, 8
      %p114 = scmp.lt.s32.totalorder %s113, 15
      %s115 = scalar_select %p114, %s113, 15
      %s116 = ssub.s32 %s31, %s43
      %s117 = ssub.s32 %s111, %s115
      %s118 = sor.u32 %s116, %s117
      %p119 = scmp.eq.s32.totalorder %s118, 0
      %s121 = sadd.s32 %s120, 1
      %s122 = scalar_select %p119, %s120, %s121
      %p125 = pneg %p119
      %p126 = scmp.eq.s32.totalorder %s24, 3
      %p127 = por %p125, %p126
      %p128 = scmp.ne.s32.totalorder %s120, %s123
      %p129 = scmp.eq.s32.totalorder %s24, 0
      %p130 = por %p128, %p129
      %p131 = scmp.ne.s32.totalorder %s120, %s123
      %p132 = scmp.eq.s32.totalorder %s29, 3
      %p133 = por %p131, %p132
      %p134 = scmp.ne.s32.totalorder %s123, %s124
      %p135 = scmp.eq.s32.totalorder %s29, 0
      %p136 = por %p134, %p135
      %p137 = scmp.ne.s32.totalorder %s123, %s124
      %p138 = scmp.eq.s32.totalorder %s30, 3
      %p139 = por %p137, %p138
      %p141 = scmp.ne.s32.totalorder %s124, %s140
      %p142 = scmp.eq.s32.totalorder %s30, 0
      %p143 = por %p141, %p142
      %s145 = sadd.s32 %s144, 1
      %p148 = scmp.eq.s32.totalorder %s24, 3
      %p149 = scmp.ne.s32.totalorder %s144, %s146
      %p150 = scmp.eq.s32.totalorder %s24, 0
      %p151 = por %p149, %p150
      %p152 = scmp.ne.s32.totalorder %s144, %s146
      %p153 = scmp.eq.s32.totalorder %s29, 3
      %p154 = por %p152, %p153
      %p155 = scmp.ne.s32.totalorder %s146, %s147
      %p156 = scmp.eq.s32.totalorder %s29, 0
      %p157 = por %p155, %p156
      %p158 = scmp.ne.s32.totalorder %s146, %s147
      %p159 = scmp.eq.s32.totalorder %s30, 3
      %p160 = por %p158, %p159
      %p162 = scmp.ne.s32.totalorder %s147, %s161
      %p163 = scmp.eq.s32.totalorder %s30, 0
      %p164 = por %p162, %p163
      %s166 = sadd.s32 %s165, 1
      %p169 = scmp.eq.s32.totalorder %s24, 3
      %p170 = scmp.ne.s32.totalorder %s165, %s167
      %p171 = scmp.eq.s32.totalorder %s24, 0
      %p172 = por %p170, %p171
      %p173 = scmp.ne.s32.totalorder %s165, %s167
      %p174 = scmp.eq.s32.totalorder %s29, 3
      %p175 = por %p173, %p174
      %p176 = scmp.ne.s32.totalorder %s167, %s168
      %p177 = scmp.eq.s32.totalorder %s29, 0
      %p178 = por %p176, %p177
      %p179 = scmp.ne.s32.totalorder %s167, %s168
      %p180 = scmp.eq.s32.totalorder %s30, 3
      %p181 = por %p179, %p180
      %p183 = scmp.ne.s32.totalorder %s168, %s182
      %p184 = scmp.eq.s32.totalorder %s30, 0
      %p185 = por %p183, %p184
      %s187 = sadd.s32 %s186, 1
      %p190 = scmp.eq.s32.totalorder %s24, 3
      %p191 = scmp.ne.s32.totalorder %s186, %s188
      %p192 = scmp.eq.s32.totalorder %s24, 0
      %p193 = por %p191, %p192
      %p194 = scmp.ne.s32.totalorder %s186, %s188
      %p195 = scmp.eq.s32.totalorder %s29, 3
      %p196 = por %p194, %p195
      %p197 = scmp.ne.s32.totalorder %s188, %s189
      %p198 = scmp.eq.s32.totalorder %s29, 0
      %p199 = por %p197, %p198
      %p200 = scmp.ne.s32.totalorder %s188, %s189
      %p201 = scmp.eq.s32.totalorder %s30, 3
      %p202 = por %p200, %p201
      %p204 = scmp.ne.s32.totalorder %s189, %s203
      %p205 = scmp.eq.s32.totalorder %s30, 0
      %p206 = por %p204, %p205
      %s208 = sadd.s32 %s207, 1
      %p211 = scmp.eq.s32.totalorder %s24, 3
      %p212 = scmp.ne.s32.totalorder %s207, %s209
      %p213 = scmp.eq.s32.totalorder %s24, 0
      %p214 = por %p212, %p213
      %p215 = scmp.ne.s32.totalorder %s207, %s209
      %p216 = scmp.eq.s32.totalorder %s29, 3
      %p217 = por %p215, %p216
      %p218 = scmp.ne.s32.totalorder %s209, %s210
      %p219 = scmp.eq.s32.totalorder %s29, 0
      %p220 = por %p218, %p219
      %p221 = scmp.ne.s32.totalorder %s209, %s210
      %p222 = scmp.eq.s32.totalorder %s30, 3
      %p223 = por %p221, %p222
      %p225 = scmp.ne.s32.totalorder %s210, %s224
      %p226 = scmp.eq.s32.totalorder %s30, 0
      %p227 = por %p225, %p226
      %s229 = sadd.s32 %s228, 1
      %p232 = scmp.eq.s32.totalorder %s24, 3
      %p233 = scmp.ne.s32.totalorder %s228, %s230
      %p234 = scmp.eq.s32.totalorder %s24, 0
      %p235 = por %p233, %p234
      %p236 = scmp.ne.s32.totalorder %s228, %s230
      %p237 = scmp.eq.s32.totalorder %s29, 3
      %p238 = por %p236, %p237
      %p239 = scmp.ne.s32.totalorder %s230, %s231
      %p240 = scmp.eq.s32.totalorder %s29, 0
      %p241 = por %p239, %p240
      %p242 = scmp.ne.s32.totalorder %s230, %s231
      %p243 = scmp.eq.s32.totalorder %s30, 3
      %p244 = por %p242, %p243
      %p246 = scmp.ne.s32.totalorder %s231, %s245
      %p247 = scmp.eq.s32.totalorder %s30, 0
      %p248 = por %p246, %p247
      %s250 = sadd.s32 %s249, 1
      %p253 = scmp.eq.s32.totalorder %s24, 3
      %p254 = scmp.ne.s32.totalorder %s249, %s251
      %p255 = scmp.eq.s32.totalorder %s24, 0
      %p256 = por %p254, %p255
      %p257 = scmp.ne.s32.totalorder %s249, %s251
      %p258 = scmp.eq.s32.totalorder %s29, 3
      %p259 = por %p257, %p258
      %p260 = scmp.ne.s32.totalorder %s251, %s252
      %p261 = scmp.eq.s32.totalorder %s29, 0
      %p262 = por %p260, %p261
      %p263 = scmp.ne.s32.totalorder %s251, %s252
      %p264 = scmp.eq.s32.totalorder %s30, 3
      %p265 = por %p263, %p264
      %p267 = scmp.ne.s32.totalorder %s252, %s266
      %p268 = scmp.eq.s32.totalorder %s30, 0
      %p269 = por %p267, %p268
      %s271 = sadd.s32 %s270, 1
      %p274 = scmp.eq.s32.totalorder %s24, 3
      %p275 = scmp.ne.s32.totalorder %s270, %s272
      %p276 = scmp.eq.s32.totalorder %s24, 0
      %p277 = por %p275, %p276
      %p278 = scmp.ne.s32.totalorder %s270, %s272
      %p279 = scmp.eq.s32.totalorder %s29, 3
      %p280 = por %p278, %p279
      %p281 = scmp.ne.s32.totalorder %s272, %s273
      %p282 = scmp.eq.s32.totalorder %s29, 0
      %p283 = por %p281, %p282
      %p284 = scmp.ne.s32.totalorder %s272, %s273
      %p285 = scmp.eq.s32.totalorder %s30, 3
      %p286 = por %p284, %p285
      %p288 = scmp.ne.s32.totalorder %s273, %s287
      %p289 = scmp.eq.s32.totalorder %s30, 0
      %p290 = por %p288, %p289
      %s292 = sadd.s32 %s291, 1
      %p295 = scmp.eq.s32.totalorder %s24, 3
      %p296 = scmp.ne.s32.totalorder %s291, %s293
      %p297 = scmp.eq.s32.totalorder %s24, 0
      %p298 = por %p296, %p297
      %p299 = scmp.ne.s32.totalorder %s291, %s293
      %p300 = scmp.eq.s32.totalorder %s29, 3
      %p301 = por %p299, %p300
      %p302 = scmp.ne.s32.totalorder %s293, %s294
      %p303 = scmp.eq.s32.totalorder %s29, 0
      %p304 = por %p302, %p303
      %p305 = scmp.ne.s32.totalorder %s293, %s294
      %p306 = scmp.eq.s32.totalorder %s30, 3
      %p307 = por %p305, %p306
      %p309 = scmp.ne.s32.totalorder %s294, %s308
      %p310 = scmp.eq.s32.totalorder %s30, 0
      %p311 = por %p309, %p310
      %s313 = sadd.s32 %s312, 1
      %p316 = scmp.eq.s32.totalorder %s24, 3
      %p317 = scmp.ne.s32.totalorder %s312, %s314
      %p318 = scmp.eq.s32.totalorder %s24, 0
      %p319 = por %p317, %p318
      %p320 = scmp.ne.s32.totalorder %s312, %s314
      %p321 = scmp.eq.s32.totalorder %s29, 3
      %p322 = por %p320, %p321
      %p323 = scmp.ne.s32.totalorder %s314, %s315
      %p324 = scmp.eq.s32.totalorder %s29, 0
      %p325 = por %p323, %p324
      %p326 = scmp.ne.s32.totalorder %s314, %s315
      %p327 = scmp.eq.s32.totalorder %s30, 3
      %p328 = por %p326, %p327
      %p330 = scmp.ne.s32.totalorder %s315, %s329
      %p331 = scmp.eq.s32.totalorder %s30, 0
      %p332 = por %p330, %p331
      %s334 = sadd.s32 %s333, 1
      %p337 = scmp.eq.s32.totalorder %s24, 3
      %p338 = scmp.ne.s32.totalorder %s333, %s335
      %p339 = scmp.eq.s32.totalorder %s24, 0
      %p340 = por %p338, %p339
      %p341 = scmp.ne.s32.totalorder %s333, %s335
      %p342 = scmp.eq.s32.totalorder %s29, 3
      %p343 = por %p341, %p342
      %p344 = scmp.ne.s32.totalorder %s335, %s336
      %p345 = scmp.eq.s32.totalorder %s29, 0
      %p346 = por %p344, %p345
      %p347 = scmp.ne.s32.totalorder %s335, %s336
      %p348 = scmp.eq.s32.totalorder %s30, 3
      %p349 = por %p347, %p348
      %p351 = scmp.ne.s32.totalorder %s336, %s350
      %p352 = scmp.eq.s32.totalorder %s30, 0
      %p353 = por %p351, %p352
      %s355 = sadd.s32 %s354, 1
      %p358 = scmp.eq.s32.totalorder %s24, 3
      %p359 = scmp.ne.s32.totalorder %s354, %s356
      %p360 = scmp.eq.s32.totalorder %s24, 0
      %p361 = por %p359, %p360
      %p362 = scmp.ne.s32.totalorder %s354, %s356
      %p363 = scmp.eq.s32.totalorder %s29, 3
      %p364 = por %p362, %p363
      %p365 = scmp.ne.s32.totalorder %s356, %s357
      %p366 = scmp.eq.s32.totalorder %s29, 0
      %p367 = por %p365, %p366
      %p368 = scmp.ne.s32.totalorder %s356, %s357
      %p369 = scmp.eq.s32.totalorder %s30, 3
      %p370 = por %p368, %p369
      %p372 = scmp.ne.s32.totalorder %s357, %s371
      %p373 = scmp.eq.s32.totalorder %s30, 0
      %p374 = por %p372, %p373
      %s376 = sadd.s32 %s375, 1
      %p379 = scmp.eq.s32.totalorder %s24, 3
      %p380 = scmp.ne.s32.totalorder %s375, %s377
      %p381 = scmp.eq.s32.totalorder %s24, 0
      %p382 = por %p380, %p381
      %p383 = scmp.ne.s32.totalorder %s375, %s377
      %p384 = scmp.eq.s32.totalorder %s29, 3
      %p385 = por %p383, %p384
      %p386 = scmp.ne.s32.totalorder %s377, %s378
      %p387 = scmp.eq.s32.totalorder %s29, 0
      %p388 = por %p386, %p387
      %p389 = scmp.ne.s32.totalorder %s377, %s378
      %p390 = scmp.eq.s32.totalorder %s30, 3
      %p391 = por %p389, %p390
      %p393 = scmp.ne.s32.totalorder %s378, %s392
      %p394 = scmp.eq.s32.totalorder %s30, 0
      %p395 = por %p393, %p394
      %s396 = ssub.s32 %s31, %s43
      %s397 = ssub.s32 %s32, %s39
      %s398 = sor.u32 %s396, %s397
      %p399 = scmp.eq.s32.totalorder %s398, 0
      %s401 = sadd.s32 %s400, 1
      %s402 = scalar_select %p399, %s400, %s401
      %p405 = pneg %p399
      %p406 = scmp.eq.s32.totalorder %s24, 3
      %p407 = por %p405, %p406
      %p408 = scmp.ne.s32.totalorder %s400, %s403
      %p409 = scmp.eq.s32.totalorder %s24, 0
      %p410 = por %p408, %p409
      %p411 = scmp.ne.s32.totalorder %s400, %s403
      %p412 = scmp.eq.s32.totalorder %s29, 3
      %p413 = por %p411, %p412
      %p414 = scmp.ne.s32.totalorder %s403, %s404
      %p415 = scmp.eq.s32.totalorder %s29, 0
      %p416 = por %p414, %p415
      %p417 = scmp.ne.s32.totalorder %s403, %s404
      %p418 = scmp.eq.s32.totalorder %s30, 3
      %p419 = por %p417, %p418
      %p421 = scmp.ne.s32.totalorder %s404, %s420
      %p422 = scmp.eq.s32.totalorder %s30, 0
      %p423 = por %p421, %p422
      %p424 = scmp.le.s32.totalorder 1, %s24
      %p425 = scmp.lt.s32.totalorder %s24, 5
      %p426 = pnand %p424, %p425
      %p427 = pneg %p426
      // Predicated region
      $region9: #{tpu_custom_call.1} parent=5 // pred_check
        _
      $region10: #{tpu_custom_call.1} parent=5 // pred_check_branch
        %429 = sbr.rel (%p426) target = $region12
      $region11: #{tpu_custom_call.1} parent=5 // pred_region
        %s430 = ssub.s32 %s24, 1
        // Predicated region
        $region13: #{tpu_custom_call.1} parent=11 // pred_check
          %p431 = pneg %p157
        $region14: #{tpu_custom_call.1} parent=11 // pred_check_branch
          %433 = sbr.rel (%p431) target = $region16
        $region15: #{tpu_custom_call.1} parent=11 // pred_region
          _
        $region16: #{tpu_custom_call.1} parent=11 // pred_fallthru
          _
        // Predicated region
        $region17: #{tpu_custom_call.1} parent=11 // pred_check
          %p434 = pneg %p178
        $region18: #{tpu_custom_call.1} parent=11 // pred_check_branch
          %436 = sbr.rel (%p434) target = $region20
        $region19: #{tpu_custom_call.1} parent=11 // pred_region
          _
        $region20: #{tpu_custom_call.1} parent=11 // pred_fallthru
          _
        // Predicated region
        $region21: #{tpu_custom_call.1} parent=11 // pred_check
          %p437 = pneg %p199
        $region22: #{tpu_custom_call.1} parent=11 // pred_check_branch
          %439 = sbr.rel (%p437) target = $region24
        $region23: #{tpu_custom_call.1} parent=11 // pred_region
          _
        $region24: #{tpu_custom_call.1} parent=11 // pred_fallthru
          _
        // Predicated region
        $region25: #{tpu_custom_call.1} parent=11 // pred_check
          %p440 = pneg %p220
        $region26: #{tpu_custom_call.1} parent=11 // pred_check_branch
          %442 = sbr.rel (%p440) target = $region28
        $region27: #{tpu_custom_call.1} parent=11 // pred_region
          _
        $region28: #{tpu_custom_call.1} parent=11 // pred_fallthru
          _
        // Predicated region
        $region29: #{tpu_custom_call.1} parent=11 // pred_check
          %p443 = pneg %p241
        $region30: #{tpu_custom_call.1} parent=11 // pred_check_branch
          %445 = sbr.rel (%p443) target = $region32
        $region31: #{tpu_custom_call.1} parent=11 // pred_region
          _
        $region32: #{tpu_custom_call.1} parent=11 // pred_fallthru
          _
        // Predicated region
        $region33: #{tpu_custom_call.1} parent=11 // pred_check
          %p446 = pneg %p262
        $region34: #{tpu_custom_call.1} parent=11 // pred_check_branch
          %448 = sbr.rel (%p446) target = $region36
        $region35: #{tpu_custom_call.1} parent=11 // pred_region
          _
        $region36: #{tpu_custom_call.1} parent=11 // pred_fallthru
          _
        // Predicated region
        $region37: #{tpu_custom_call.1} parent=11 // pred_check
          %p449 = pneg %p283
        $region38: #{tpu_custom_call.1} parent=11 // pred_check_branch
          %451 = sbr.rel (%p449) target = $region40
        $region39: #{tpu_custom_call.1} parent=11 // pred_region
          _
        $region40: #{tpu_custom_call.1} parent=11 // pred_fallthru
          _
        // Predicated region
        $region41: #{tpu_custom_call.1} parent=11 // pred_check
          %p452 = pneg %p304
        $region42: #{tpu_custom_call.1} parent=11 // pred_check_branch
          %454 = sbr.rel (%p452) target = $region44
        $region43: #{tpu_custom_call.1} parent=11 // pred_region
          _
        $region44: #{tpu_custom_call.1} parent=11 // pred_fallthru
          _
        // Predicated region
        $region45: #{tpu_custom_call.1} parent=11 // pred_check
          %p455 = pneg %p325
        $region46: #{tpu_custom_call.1} parent=11 // pred_check_branch
          %457 = sbr.rel (%p455) target = $region48
        $region47: #{tpu_custom_call.1} parent=11 // pred_region
          _
        $region48: #{tpu_custom_call.1} parent=11 // pred_fallthru
          _
        // Predicated region
        $region49: #{tpu_custom_call.1} parent=11 // pred_check
          %p458 = pneg %p346
        $region50: #{tpu_custom_call.1} parent=11 // pred_check_branch
          %460 = sbr.rel (%p458) target = $region52
        $region51: #{tpu_custom_call.1} parent=11 // pred_region
          _
        $region52: #{tpu_custom_call.1} parent=11 // pred_fallthru
          _
        // Predicated region
        $region53: #{tpu_custom_call.1} parent=11 // pred_check
          %p461 = pneg %p367
        $region54: #{tpu_custom_call.1} parent=11 // pred_check_branch
          %463 = sbr.rel (%p461) target = $region56
        $region55: #{tpu_custom_call.1} parent=11 // pred_region
          _
        $region56: #{tpu_custom_call.1} parent=11 // pred_fallthru
          _
        // Predicated region
        $region57: #{tpu_custom_call.1} parent=11 // pred_check
          %p464 = pneg %p388
        $region58: #{tpu_custom_call.1} parent=11 // pred_check_branch
          %466 = sbr.rel (%p464) target = $region60
        $region59: #{tpu_custom_call.1} parent=11 // pred_region
          _
        $region60: #{tpu_custom_call.1} parent=11 // pred_fallthru
          _
      $region12: #{tpu_custom_call.1} parent=5 // pred_fallthru
        _
      %p467 = scmp.lt.s32.totalorder %s24, 4
      // Predicated region
      $region61: #{tpu_custom_call.1} parent=5 // pred_check
        %p468 = pneg %p467
      $region62: #{tpu_custom_call.1} parent=5 // pred_check_branch
        %470 = sbr.rel (%p468) target = $region64
      $region63: #{tpu_custom_call.1} parent=5 // pred_region
        // Predicated region
        $region65: #{tpu_custom_call.1} parent=63 // pred_check
          %p471 = pneg %p58
        $region66: #{tpu_custom_call.1} parent=63 // pred_check_branch
          %473 = sbr.rel (%p471) target = $region68
        $region67: #{tpu_custom_call.1} parent=63 // pred_region
          %s474 = smul.u32 8, %s32
          %p475 = scmp.lt.s32.totalorder %s31, 1
          %s476 = scalar_select %p475, %s31, 1
          %p477 = scmp.lt.s32.totalorder %s474, 15
          %s478 = scalar_select %p477, %s474, 15
          %s479 = smul.addr %s478, 2
          %s480 = smul.addr %s476, 32
          %s481 = sadd.s32 %s479, %s480
          %s482 = smul.addr %s481, 8
          %s483 = scalar_lea.vmem %s0, %s482
          %s484 = smul.u32 8, %s32
        $region68: #{tpu_custom_call.1} parent=63 // pred_fallthru
          _
        // Predicated region
        $region69: #{tpu_custom_call.1} parent=63 // pred_check
          %p485 = pneg %p94
        $region70: #{tpu_custom_call.1} parent=63 // pred_check_branch
          %487 = sbr.rel (%p485) target = $region72
        $region71: #{tpu_custom_call.1} parent=63 // pred_region
          %s488 = smul.u32 %s32, 8
          %s489 = ssub.s32 %s488, 1
          %p490 = scmp.gt.s32.totalorder %s489, 0
          %s491 = scalar_select %p490, %s489, 0
          %p492 = scmp.lt.s32.totalorder %s31, 1
          %s493 = scalar_select %p492, %s31, 1
          %p494 = scmp.lt.s32.totalorder %s491, 15
          %s495 = scalar_select %p494, %s491, 15
          %s496 = smul.addr %s495, 2
          %s497 = smul.addr %s493, 32
          %s498 = sadd.s32 %s496, %s497
          %s499 = smul.addr %s498, 8
          %s500 = scalar_lea.vmem %s1, %s499
          %s501 = smul.u32 %s32, 8
          %s502 = ssub.s32 %s501, 1
          %p503 = scmp.gt.s32.totalorder %s502, 0
          %s504 = scalar_select %p503, %s502, 0
        $region72: #{tpu_custom_call.1} parent=63 // pred_fallthru
          _
        // Predicated region
        $region73: #{tpu_custom_call.1} parent=63 // pred_check
          %p505 = pneg %p130
        $region74: #{tpu_custom_call.1} parent=63 // pred_check_branch
          %507 = sbr.rel (%p505) target = $region76
        $region75: #{tpu_custom_call.1} parent=63 // pred_region
          %s508 = sadd.s32 %s32, 1
          %s509 = smul.u32 %s508, 8
          %p510 = scmp.lt.s32.totalorder %s509, 15
          %s511 = scalar_select %p510, %s509, 15
          %p512 = scmp.lt.s32.totalorder %s31, 1
          %s513 = scalar_select %p512, %s31, 1
          %p514 = scmp.lt.s32.totalorder %s511, 15
          %s515 = scalar_select %p514, %s511, 15
          %s516 = smul.addr %s515, 2
          %s517 = smul.addr %s513, 32
          %s518 = sadd.s32 %s516, %s517
          %s519 = smul.addr %s518, 8
          %s520 = scalar_lea.vmem %s2, %s519
          %s521 = sadd.s32 %s32, 1
          %s522 = smul.u32 %s521, 8
          %p523 = scmp.lt.s32.totalorder %s522, 15
          %s524 = scalar_select %p523, %s522, 15
        $region76: #{tpu_custom_call.1} parent=63 // pred_fallthru
          _
      $region64: #{tpu_custom_call.1} parent=5 // pred_fallthru
        _
      %p525 = scmp.le.s32.totalorder 1, %s24
      %p526 = scmp.lt.s32.totalorder %s24, 5
      %p527 = pnand %p525, %p526
      %p528 = pneg %p527
      // Predicated region
      $region77: #{tpu_custom_call.1} parent=5 // pred_check
        _
      $region78: #{tpu_custom_call.1} parent=5 // pred_check_branch
        %530 = sbr.rel (%p527) target = $region80
      $region79: #{tpu_custom_call.1} parent=5 // pred_region
        %s531 = ssub.s32 %s24, 1
        %s532 = smul.u32 8, %s34
        %p533 = scmp.lt.s32.totalorder %s33, 1
        %s534 = scalar_select %p533, %s33, 1
        %p535 = scmp.lt.s32.totalorder %s532, 15
        %s536 = scalar_select %p535, %s532, 15
        %s537 = smul.addr %s536, 2
        %s538 = smul.addr %s534, 32
        %s539 = sadd.s32 %s537, %s538
        %s540 = smul.addr %s539, 8
        %s541 = scalar_lea.vmem %s0, %s540
        %p542 = pneg %p64
        %p543 = pneg %p61
        %s544 = smul.u32 %s34, 8
        %s545 = ssub.s32 %s544, 1
        %p546 = scmp.gt.s32.totalorder %s545, 0
        %s547 = scalar_select %p546, %s545, 0
        %p548 = scmp.lt.s32.totalorder %s33, 1
        %s549 = scalar_select %p548, %s33, 1
        %p550 = scmp.lt.s32.totalorder %s547, 15
        %s551 = scalar_select %p550, %s547, 15
        %s552 = smul.addr %s551, 2
        %s553 = smul.addr %s549, 32
        %s554 = sadd.s32 %s552, %s553
        %s555 = smul.addr %s554, 8
        %s556 = scalar_lea.vmem %s1, %s555
        %p557 = pneg %p100
        %p558 = pneg %p97
        %s559 = sadd.s32 %s34, 1
        %s560 = smul.u32 %s559, 8
        %p561 = scmp.lt.s32.totalorder %s560, 15
        %s562 = scalar_select %p561, %s560, 15
        %p563 = scmp.lt.s32.totalorder %s33, 1
        %s564 = scalar_select %p563, %s33, 1
        %p565 = scmp.lt.s32.totalorder %s562, 15
        %s566 = scalar_select %p565, %s562, 15
        %s567 = smul.addr %s566, 2
        %s568 = smul.addr %s564, 32
        %s569 = sadd.s32 %s567, %s568
        %s570 = smul.addr %s569, 8
        %s571 = scalar_lea.vmem %s2, %s570
        %p572 = pneg %p136
        %p573 = pneg %p133
        %p574 = pneg %p157
        %p575 = pneg %p154
        %p576 = pneg %p178
        %p577 = pneg %p175
        %p578 = pneg %p199
        %p579 = pneg %p196
        %p580 = pneg %p220
        %p581 = pneg %p217
        %p582 = pneg %p241
        %p583 = pneg %p238
        %p584 = pneg %p262
        %p585 = pneg %p259
        %p586 = pneg %p283
        %p587 = pneg %p280
        %p588 = pneg %p304
        %p589 = pneg %p301
        %p590 = pneg %p325
        %p591 = pneg %p322
        %p592 = pneg %p346
        %p593 = pneg %p343
        %p594 = pneg %p367
        %p595 = pneg %p364
        %p596 = pneg %p388
        %p597 = pneg %p385
        %p598 = pneg %p416
        %p599 = pneg %p413
        %s600 = sand.u32 %s403, 1
        %s601 = scalar_lea.sflag [#allocation4], %s600
        %s602 = sand.u32 %s403, 1
        %s603 = smul.addr %s602, 128
        %s604 = scalar_lea.vmem [#allocation3], %s603
        %s605 = smul.u32 8, %s34
        %p606 = scmp.lt.s32.totalorder %s33, 1
        %s607 = scalar_select %p606, %s33, 1
        %p608 = scmp.lt.s32.totalorder %s605, 15
        %s609 = scalar_select %p608, %s605, 15
        %s610 = smul.addr %s609, 2
        %s611 = smul.addr %s607, 32
        %s612 = sadd.s32 %s610, %s611
        %s613 = smul.addr %s612, 8
        %s614 = scalar_lea.vmem %s0, %s613
        %s615 = smul.u32 8, %s34
        %s616 = smul.u32 %s34, 8
        %s617 = ssub.s32 %s616, 1
        %p618 = scmp.gt.s32.totalorder %s617, 0
        %s619 = scalar_select %p618, %s617, 0
        %p620 = scmp.lt.s32.totalorder %s33, 1
        %s621 = scalar_select %p620, %s33, 1
        %p622 = scmp.lt.s32.totalorder %s619, 15
        %s623 = scalar_select %p622, %s619, 15
        %s624 = smul.addr %s623, 2
        %s625 = smul.addr %s621, 32
        %s626 = sadd.s32 %s624, %s625
        %s627 = smul.addr %s626, 8
        %s628 = scalar_lea.vmem %s1, %s627
        %s629 = smul.u32 %s34, 8
        %s630 = ssub.s32 %s629, 1
        %p631 = scmp.gt.s32.totalorder %s630, 0
        %s632 = scalar_select %p631, %s630, 0
        %s633 = sadd.s32 %s34, 1
        %s634 = smul.u32 %s633, 8
        %p635 = scmp.lt.s32.totalorder %s634, 15
        %s636 = scalar_select %p635, %s634, 15
        %p637 = scmp.lt.s32.totalorder %s33, 1
        %s638 = scalar_select %p637, %s33, 1
        %p639 = scmp.lt.s32.totalorder %s636, 15
        %s640 = scalar_select %p639, %s636, 15
        %s641 = smul.addr %s640, 2
        %s642 = smul.addr %s638, 32
        %s643 = sadd.s32 %s641, %s642
        %s644 = smul.addr %s643, 8
        %s645 = scalar_lea.vmem %s2, %s644
        %s646 = sadd.s32 %s34, 1
        %s647 = smul.u32 %s646, 8
        %p648 = scmp.lt.s32.totalorder %s647, 15
        %s649 = scalar_select %p648, %s647, 15
        %s650 = smul.u32 8, %s34
        %vm651 = vcmask 24576
        %652 = vst.msk [vmem:[#allocation2] sm:$0x1] %vm651, 0.0
        %653 = vst.msk [vmem:[#allocation2 + $0x18] sm:$0x1] %vm651, 0.0
        %654 = vst.msk [vmem:[#allocation2 + $0x30] sm:$0x1] %vm651, 0.0
        %655 = vst.msk [vmem:[#allocation2 + $0x48] sm:$0x1] %vm651, 0.0
        %656 = vst.msk [vmem:[#allocation2 + $0x60] sm:$0x1] %vm651, 0.0
        %657 = vst.msk [vmem:[#allocation2 + $0x78] sm:$0x1] %vm651, 0.0
        %658 = vst.msk [vmem:[#allocation2 + $0x90] sm:$0x1] %vm651, 0.0
        %659 = vst.msk [vmem:[#allocation2 + $0xa8] sm:$0x1] %vm651, 0.0
        %660 = vst.msk [vmem:[#allocation2 + $0xc0] sm:$0x1] %vm651, 0.0
        %661 = vst.msk [vmem:[#allocation2 + $0xd8] sm:$0x1] %vm651, 0.0
        %662 = vst.msk [vmem:[#allocation2 + $0x11] sm:$0x1] %vm651, 0.0
        %663 = vst.msk [vmem:[#allocation2 + $0x29] sm:$0x1] %vm651, 0.0
        %664 = vst.msk [vmem:[#allocation2 + $0x41] sm:$0x1] %vm651, 0.0
        %665 = vst.msk [vmem:[#allocation2 + $0x59] sm:$0x1] %vm651, 0.0
        %666 = vst.msk [vmem:[#allocation2 + $0x71] sm:$0x1] %vm651, 0.0
        %667 = vst.msk [vmem:[#allocation2 + $0x89] sm:$0x1] %vm651, 0.0
        %668 = vst.msk [vmem:[#allocation2 + $0xa1] sm:$0x1] %vm651, 0.0
        %669 = vst.msk [vmem:[#allocation2 + $0xb9] sm:$0x1] %vm651, 0.0
        %670 = vst.msk [vmem:[#allocation2 + $0xd1] sm:$0x1] %vm651, 0.0
        %671 = vst.msk [vmem:[#allocation2 + $0xe9] sm:$0x1] %vm651, 0.0
        %v672 = vld [vmem:[%s614] sm:$0xff]
        %v673 = vld [vmem:[%s614 + $0x8] sm:$0xff]
        %v674 = vld [vmem:[%s614 + $0x10] sm:$0xff]
        %v675 = vld [vmem:[%s614 + $0x18] sm:$0xff]
        %v676 = vld [vmem:[%s614 + $0x20] sm:$0xff]
        %v677 = vld [vmem:[%s614 + $0x28] sm:$0xff]
        %v678 = vld [vmem:[%s614 + $0x30] sm:$0xff]
        %v679 = vld [vmem:[%s614 + $0x38] sm:$0xff]
        %v680 = vld [vmem:[%s614 + $0x40] sm:$0xff]
        %v681 = vld [vmem:[%s614 + $0x48] sm:$0xff]
        %v682 = vld [vmem:[%s614 + $0x50] sm:$0xff]
        %v683 = vld [vmem:[%s614 + $0x58] sm:$0xff]
        %v684 = vld [vmem:[%s614 + $0x60] sm:$0xff]
        %v685 = vld [vmem:[%s614 + $0x68] sm:$0xff]
        %v686 = vld [vmem:[%s614 + $0x70] sm:$0xff]
        %v687 = vld [vmem:[%s614 + $0x78] sm:$0xff]
        %v688 = vld [vmem:[%s3] sm:$0xf]
        %vm689 = vcmask 31744
        %v691 = vsel %vm689, %v672, 0
        %v694 = vsel %vm689, %v673, 0
        %v697 = vsel %vm689, %v674, 0
        %v700 = vsel %vm689, %v675, 0
        %v703 = vsel %vm689, %v676, 0
        %v706 = vsel %vm689, %v677, 0
        %v709 = vsel %vm689, %v678, 0
        %v712 = vsel %vm689, %v679, 0
        %v715 = vsel %vm689, %v680, 0
        %v718 = vsel %vm689, %v681, 0
        %v721 = vsel %vm689, %v682, 0
        %v724 = vsel %vm689, %v683, 0
        %v727 = vsel %vm689, %v684, 0
        %v730 = vsel %vm689, %v685, 0
        %v733 = vsel %vm689, %v686, 0
        %v736 = vsel %vm689, %v687, 0
        %vm738 = vcmask 1043456
        %v740 = vsel %vm738, %v688, 0
        %742 = vmatpush.msra.mxu0 0.0
        %743 = vmatpush.msra.mxu0 0.0
        %744 = vmatpush.msra.mxu0 0.0
        %745 = vmatpush.msra.mxu0 0.0
        %746 = vmatpush.msra.mxu0 0.0
        %747 = vmatpush.msra.mxu0 0.0
        %748 = vmatpush.msra.mxu0 0.0
        %749 = vmatpush.msra.mxu0 0.0
        %750 = vmatpush.msra.mxu0 0.0
        %751 = vmatpush.msra.mxu0 0.0
        %752 = vmatpush.msra.mxu0 0.0
        %753 = vmatpush.msra.mxu0 0.0
        %754 = vmatpush.msra.mxu0 0.0
        %755 = vmatpush.msra.mxu0 0.0
        %756 = vmatpush.msra.mxu0 0.0
        %757 = vmatpush.msra.mxu0 %v740
        %758 = vmatmul.f32.gmra.mxu0 %v691
        %v759 = vpop.f32.mrf.mxu0
        %v760 = vadd.f32 0.0, %v759
        %761 = vmatmul.f32.gmra.mxu0 %v694
        %v762 = vpop.f32.mrf.mxu0
        %v763 = vadd.f32 0.0, %v762
        %764 = vmatmul.f32.gmra.mxu0 %v697
        %v765 = vpop.f32.mrf.mxu0
        %v766 = vadd.f32 0.0, %v765
        %767 = vmatmul.f32.gmra.mxu0 %v700
        %v768 = vpop.f32.mrf.mxu0
        %v769 = vadd.f32 0.0, %v768
        %770 = vmatmul.f32.gmra.mxu0 %v703
        %v771 = vpop.f32.mrf.mxu0
        %v772 = vadd.f32 0.0, %v771
        %773 = vmatmul.f32.gmra.mxu0 %v706
        %v774 = vpop.f32.mrf.mxu0
        %v775 = vadd.f32 0.0, %v774
        %776 = vmatmul.f32.gmra.mxu0 %v709
        %v777 = vpop.f32.mrf.mxu0
        %v778 = vadd.f32 0.0, %v777
        %779 = vmatmul.f32.gmra.mxu0 %v712
        %v780 = vpop.f32.mrf.mxu0
        %v781 = vadd.f32 0.0, %v780
        %782 = vmatmul.f32.gmra.mxu0 %v715
        %v783 = vpop.f32.mrf.mxu0
        %v784 = vadd.f32 0.0, %v783
        %785 = vmatmul.f32.gmra.mxu0 %v718
        %v786 = vpop.f32.mrf.mxu0
        %v787 = vadd.f32 0.0, %v786
        %788 = vmatmul.f32.gmra.mxu0 %v721
        %v789 = vpop.f32.mrf.mxu0
        %v790 = vadd.f32 0.0, %v789
        %791 = vmatmul.f32.gmra.mxu0 %v724
        %v792 = vpop.f32.mrf.mxu0
        %v793 = vadd.f32 0.0, %v792
        %794 = vmatmul.f32.gmra.mxu0 %v727
        %v795 = vpop.f32.mrf.mxu0
        %v796 = vadd.f32 0.0, %v795
        %797 = vmatmul.f32.gmra.mxu0 %v730
        %v798 = vpop.f32.mrf.mxu0
        %v799 = vadd.f32 0.0, %v798
        %800 = vmatmul.f32.gmra.mxu0 %v733
        %v801 = vpop.f32.mrf.mxu0
        %v802 = vadd.f32 0.0, %v801
        %803 = vmatmul.f32.gmra.mxu0 %v736
        %v804 = vpop.f32.mrf.mxu0
        %v805 = vadd.f32 0.0, %v804
        %806 = vdwg.mxu0
        %v807 = vld [vmem:[%s4] sm:$0x1]
        %v809 = vperm.slane %v807, 0
        %v811 = vmul.f32 %v760, %v809
        %v812 = vmul.f32 %v763, %v809
        %v813 = vmul.f32 %v766, %v809
        %v814 = vmul.f32 %v769, %v809
        %v815 = vmul.f32 %v772, %v809
        %v816 = vmul.f32 %v775, %v809
        %v817 = vmul.f32 %v778, %v809
        %v818 = vmul.f32 %v781, %v809
        %v819 = vmul.f32 %v784, %v809
        %v820 = vmul.f32 %v787, %v809
        %v821 = vmul.f32 %v790, %v809
        %v822 = vmul.f32 %v793, %v809
        %v823 = vmul.f32 %v796, %v809
        %v824 = vmul.f32 %v799, %v809
        %v825 = vmul.f32 %v802, %v809
        %v826 = vmul.f32 %v805, %v809
        %v827 = vld [vmem:[%s5] sm:$0x1]
        %v829 = vperm.slane %v827, 0
        %v831 = vadd.f32 %v811, %v829
        %v832 = vadd.f32 %v812, %v829
        %v833 = vadd.f32 %v813, %v829
        %v834 = vadd.f32 %v814, %v829
        %v835 = vadd.f32 %v815, %v829
        %v836 = vadd.f32 %v816, %v829
        %v837 = vadd.f32 %v817, %v829
        %v838 = vadd.f32 %v818, %v829
        %v839 = vadd.f32 %v819, %v829
        %v840 = vadd.f32 %v820, %v829
        %v841 = vadd.f32 %v821, %v829
        %v842 = vadd.f32 %v822, %v829
        %v843 = vadd.f32 %v823, %v829
        %v844 = vadd.f32 %v824, %v829
        %v845 = vadd.f32 %v825, %v829
        %v846 = vadd.f32 %v826, %v829
        %v847 = vmax.f32 %v831, 0.0
        %v848 = vmax.f32 %v832, 0.0
        %v849 = vmax.f32 %v833, 0.0
        %v850 = vmax.f32 %v834, 0.0
        %v851 = vmax.f32 %v835, 0.0
        %v852 = vmax.f32 %v836, 0.0
        %v853 = vmax.f32 %v837, 0.0
        %v854 = vmax.f32 %v838, 0.0
        %v855 = vmax.f32 %v839, 0.0
        %v856 = vmax.f32 %v840, 0.0
        %v857 = vmax.f32 %v841, 0.0
        %v858 = vmax.f32 %v842, 0.0
        %v859 = vmax.f32 %v843, 0.0
        %v860 = vmax.f32 %v844, 0.0
        %v861 = vmax.f32 %v845, 0.0
        %v862 = vmax.f32 %v846, 0.0
        %s863 = scalar_lea.vmem [#allocation2], 24
        %864 = vst.msk [vmem:[%s863 + $0x1] sm:$0xff] %vm689, %v847
        %865 = vst.msk [vmem:[%s863 + $0x9] sm:$0xff] %vm689, %v848
        %866 = vst.msk [vmem:[%s863 + $0x19] sm:$0xff] %vm689, %v849
        %867 = vst.msk [vmem:[%s863 + $0x21] sm:$0xff] %vm689, %v850
        %868 = vst.msk [vmem:[%s863 + $0x31] sm:$0xff] %vm689, %v851
        %869 = vst.msk [vmem:[%s863 + $0x39] sm:$0xff] %vm689, %v852
        %870 = vst.msk [vmem:[%s863 + $0x49] sm:$0xff] %vm689, %v853
        %871 = vst.msk [vmem:[%s863 + $0x51] sm:$0xff] %vm689, %v854
        %872 = vst.msk [vmem:[%s863 + $0x61] sm:$0xff] %vm689, %v855
        %873 = vst.msk [vmem:[%s863 + $0x69] sm:$0xff] %vm689, %v856
        %874 = vst.msk [vmem:[%s863 + $0x79] sm:$0xff] %vm689, %v857
        %875 = vst.msk [vmem:[%s863 + $0x81] sm:$0xff] %vm689, %v858
        %876 = vst.msk [vmem:[%s863 + $0x91] sm:$0xff] %vm689, %v859
        %877 = vst.msk [vmem:[%s863 + $0x99] sm:$0xff] %vm689, %v860
        %878 = vst.msk [vmem:[%s863 + $0xa9] sm:$0xff] %vm689, %v861
        %879 = vst.msk [vmem:[%s863 + $0xb1] sm:$0xff] %vm689, %v862
        %p880 = scmp.gt.s32.totalorder %s34, 0
        // Predicated region
        $region81: #{tpu_custom_call.1} parent=79 // pred_check
          %p881 = pneg %p880
        $region82: #{tpu_custom_call.1} parent=79 // pred_check_branch
          %883 = sbr.rel (%p881) target = $region84
        $region83: #{tpu_custom_call.1} parent=79 // pred_region
          %v884 = vld [vmem:[%s628] sm:$0xff]
          %v885 = vld [vmem:[%s628 + $0x8] sm:$0xff]
          %v886 = vld [vmem:[%s3] sm:$0xf]
          %v888 = vsel %vm689, %v884, 0
          %v891 = vsel %vm689, %v885, 0
          %v894 = vsel %vm738, %v886, 0
          %896 = vmatpush.msra.mxu0 0.0
          %897 = vmatpush.msra.mxu0 0.0
          %898 = vmatpush.msra.mxu0 0.0
          %899 = vmatpush.msra.mxu0 0.0
          %900 = vmatpush.msra.mxu0 0.0
          %901 = vmatpush.msra.mxu0 0.0
          %902 = vmatpush.msra.mxu0 0.0
          %903 = vmatpush.msra.mxu0 0.0
          %904 = vmatpush.msra.mxu0 0.0
          %905 = vmatpush.msra.mxu0 0.0
          %906 = vmatpush.msra.mxu0 0.0
          %907 = vmatpush.msra.mxu0 0.0
          %908 = vmatpush.msra.mxu0 0.0
          %909 = vmatpush.msra.mxu0 0.0
          %910 = vmatpush.msra.mxu0 0.0
          %911 = vmatpush.msra.mxu0 %v894
          %912 = vmatmul.f32.gmra.mxu0 %v888
          %v913 = vpop.f32.mrf.mxu0
          %v914 = vadd.f32 0.0, %v913
          %915 = vmatmul.f32.gmra.mxu0 %v891
          %v916 = vpop.f32.mrf.mxu0
          %v917 = vadd.f32 0.0, %v916
          %918 = vdwg.mxu0
          %v919 = vld [vmem:[%s4] sm:$0x1]
          %v921 = vperm.slane %v919, 0
          %v923 = vmul.f32 %v914, %v921
          %v924 = vmul.f32 %v917, %v921
          %v925 = vld [vmem:[%s5] sm:$0x1]
          %v927 = vperm.slane %v925, 0
          %v929 = vadd.f32 %v923, %v927
          %v930 = vadd.f32 %v924, %v927
          %v931 = vmax.f32 %v929, 0.0
          %v932 = vmax.f32 %v930, 0.0
          %933 = vst.msk [vmem:[#allocation2 + $0x1] sm:$0xff] %vm689, %v931
          %934 = vst.msk [vmem:[#allocation2 + $0x9] sm:$0xff] %vm689, %v932
        $region84: #{tpu_custom_call.1} parent=79 // pred_fallthru
          _
        %p935 = scmp.eq.s32.totalorder %s34, 0
        // Predicated region
        $region85: #{tpu_custom_call.1} parent=79 // pred_check
          %p936 = pneg %p935
        $region86: #{tpu_custom_call.1} parent=79 // pred_check_branch
          %938 = sbr.rel (%p936) target = $region88
        $region87: #{tpu_custom_call.1} parent=79 // pred_region
          %939 = vst.msk [vmem:[#allocation2] sm:$0xff] %vm689, 0.0
          %940 = vst.msk [vmem:[#allocation2 + $0x8] sm:$0xff] %vm689, 0.0
          %vm941 = vcmask 25600
          %942 = vst.msk [vmem:[#allocation2 + $0x10] sm:$0x3] %vm941, 0.0
        $region88: #{tpu_custom_call.1} parent=79 // pred_fallthru
          _
        %p943 = scmp.lt.s32.totalorder %s34, 1
        // Predicated region
        $region89: #{tpu_custom_call.1} parent=79 // pred_check
          %p944 = pneg %p943
        $region90: #{tpu_custom_call.1} parent=79 // pred_check_branch
          %946 = sbr.rel (%p944) target = $region92
        $region91: #{tpu_custom_call.1} parent=79 // pred_region
          %v947 = vld [vmem:[%s645] sm:$0xff]
          %v948 = vld [vmem:[%s645 + $0x8] sm:$0xff]
          %v949 = vld [vmem:[%s3] sm:$0xf]
          %v951 = vsel %vm689, %v947, 0
          %v954 = vsel %vm689, %v948, 0
          %v957 = vsel %vm738, %v949, 0
          %959 = vmatpush.msra.mxu0 0.0
          %960 = vmatpush.msra.mxu0 0.0
          %961 = vmatpush.msra.mxu0 0.0
          %962 = vmatpush.msra.mxu0 0.0
          %963 = vmatpush.msra.mxu0 0.0
          %964 = vmatpush.msra.mxu0 0.0
          %965 = vmatpush.msra.mxu0 0.0
          %966 = vmatpush.msra.mxu0 0.0
          %967 = vmatpush.msra.mxu0 0.0
          %968 = vmatpush.msra.mxu0 0.0
          %969 = vmatpush.msra.mxu0 0.0
          %970 = vmatpush.msra.mxu0 0.0
          %971 = vmatpush.msra.mxu0 0.0
          %972 = vmatpush.msra.mxu0 0.0
          %973 = vmatpush.msra.mxu0 0.0
          %974 = vmatpush.msra.mxu0 %v957
          %975 = vmatmul.f32.gmra.mxu0 %v951
          %v976 = vpop.f32.mrf.mxu0
          %v977 = vadd.f32 0.0, %v976
          %978 = vmatmul.f32.gmra.mxu0 %v954
          %v979 = vpop.f32.mrf.mxu0
          %v980 = vadd.f32 0.0, %v979
          %981 = vdwg.mxu0
          %v982 = vld [vmem:[%s4] sm:$0x1]
          %v984 = vperm.slane %v982, 0
          %v986 = vmul.f32 %v977, %v984
          %v987 = vmul.f32 %v980, %v984
          %v988 = vld [vmem:[%s5] sm:$0x1]
          %v990 = vperm.slane %v988, 0
          %v992 = vadd.f32 %v986, %v990
          %v993 = vadd.f32 %v987, %v990
          %v994 = vmax.f32 %v992, 0.0
          %v995 = vmax.f32 %v993, 0.0
          %s996 = scalar_lea.vmem [#allocation2], 216
          %997 = vst.msk [vmem:[%s996 + $0x1] sm:$0xff] %vm689, %v994
          %998 = vst.msk [vmem:[%s996 + $0x9] sm:$0xff] %vm689, %v995
        $region92: #{tpu_custom_call.1} parent=79 // pred_fallthru
          _
        %p999 = scmp.eq.s32.totalorder %s34, 1
        // Predicated region
        $region93: #{tpu_custom_call.1} parent=79 // pred_check
          %p1000 = pneg %p999
        $region94: #{tpu_custom_call.1} parent=79 // pred_check_branch
          %1002 = sbr.rel (%p1000) target = $region96
        $region95: #{tpu_custom_call.1} parent=79 // pred_region
          %s1003 = scalar_lea.vmem [#allocation2], 216
          %1004 = vst.msk [vmem:[%s1003] sm:$0xff] %vm689, 0.0
          %1005 = vst.msk [vmem:[%s1003 + $0x8] sm:$0xff] %vm689, 0.0
          %vm1006 = vcmask 25600
          %1007 = vst.msk [vmem:[%s1003 + $0x10] sm:$0x3] %vm1006, 0.0
        $region96: #{tpu_custom_call.1} parent=79 // pred_fallthru
          _
        %v1008 = vld [vmem:[#allocation2] sm:$0xff]
        %v1009 = vld [vmem:[#allocation2 + $0x8] sm:$0xff]
        %v1010 = vld [vmem:[#allocation2 + $0x18] sm:$0xff]
        %v1011 = vld [vmem:[#allocation2 + $0x20] sm:$0xff]
        %v1012 = vld [vmem:[#allocation2 + $0x30] sm:$0xff]
        %v1013 = vld [vmem:[#allocation2 + $0x38] sm:$0xff]
        %v1014 = vld [vmem:[#allocation2 + $0x48] sm:$0xff]
        %v1015 = vld [vmem:[#allocation2 + $0x50] sm:$0xff]
        %v1016 = vld [vmem:[#allocation2 + $0x60] sm:$0xff]
        %v1017 = vld [vmem:[#allocation2 + $0x68] sm:$0xff]
        %v1018 = vld [vmem:[#allocation2 + $0x78] sm:$0xff]
        %v1019 = vld [vmem:[#allocation2 + $0x80] sm:$0xff]
        %v1020 = vld [vmem:[#allocation2 + $0x90] sm:$0xff]
        %v1021 = vld [vmem:[#allocation2 + $0x98] sm:$0xff]
        %v1022 = vld [vmem:[#allocation2 + $0xa8] sm:$0xff]
        %v1023 = vld [vmem:[#allocation2 + $0xb0] sm:$0xff]
        %v1024 = vld [vmem:[#allocation2 + $0x1] sm:$0xff]
        %v1025 = vld [vmem:[#allocation2 + $0x9] sm:$0xff]
        %v1026 = vld [vmem:[#allocation2 + $0x19] sm:$0xff]
        %v1027 = vld [vmem:[#allocation2 + $0x21] sm:$0xff]
        %v1028 = vld [vmem:[#allocation2 + $0x31] sm:$0xff]
        %v1029 = vld [vmem:[#allocation2 + $0x39] sm:$0xff]
        %v1030 = vld [vmem:[#allocation2 + $0x49] sm:$0xff]
        %v1031 = vld [vmem:[#allocation2 + $0x51] sm:$0xff]
        %v1032 = vld [vmem:[#allocation2 + $0x61] sm:$0xff]
        %v1033 = vld [vmem:[#allocation2 + $0x69] sm:$0xff]
        %v1034 = vld [vmem:[#allocation2 + $0x79] sm:$0xff]
        %v1035 = vld [vmem:[#allocation2 + $0x81] sm:$0xff]
        %v1036 = vld [vmem:[#allocation2 + $0x91] sm:$0xff]
        %v1037 = vld [vmem:[#allocation2 + $0x99] sm:$0xff]
        %v1038 = vld [vmem:[#allocation2 + $0xa9] sm:$0xff]
        %v1039 = vld [vmem:[#allocation2 + $0xb1] sm:$0xff]
        %v1040 = vld [vmem:[#allocation2 + $0x2] sm:$0xff]
        %v1041 = vld [vmem:[#allocation2 + $0xa] sm:$0xff]
        %v1042 = vld [vmem:[#allocation2 + $0x1a] sm:$0xff]
        %v1043 = vld [vmem:[#allocation2 + $0x22] sm:$0xff]
        %v1044 = vld [vmem:[#allocation2 + $0x32] sm:$0xff]
        %v1045 = vld [vmem:[#allocation2 + $0x3a] sm:$0xff]
        %v1046 = vld [vmem:[#allocation2 + $0x4a] sm:$0xff]
        %v1047 = vld [vmem:[#allocation2 + $0x52] sm:$0xff]
        %v1048 = vld [vmem:[#allocation2 + $0x62] sm:$0xff]
        %v1049 = vld [vmem:[#allocation2 + $0x6a] sm:$0xff]
        %v1050 = vld [vmem:[#allocation2 + $0x7a] sm:$0xff]
        %v1051 = vld [vmem:[#allocation2 + $0x82] sm:$0xff]
        %v1052 = vld [vmem:[#allocation2 + $0x92] sm:$0xff]
        %v1053 = vld [vmem:[#allocation2 + $0x9a] sm:$0xff]
        %v1054 = vld [vmem:[#allocation2 + $0xaa] sm:$0xff]
        %v1055 = vld [vmem:[#allocation2 + $0xb2] sm:$0xff]
        %1072 = vrot.lane.b32.xlu0 %v1024, 4
        %v1073 = vpop.permute.xlu0 %1072
        %1074 = vrot.lane.b32.xlu0 %v1025, 4
        %v1075 = vpop.permute.xlu0 %1074
        %1076 = vrot.lane.b32.xlu0 %v1026, 4
        %v1077 = vpop.permute.xlu0 %1076
        %1078 = vrot.lane.b32.xlu0 %v1027, 4
        %v1079 = vpop.permute.xlu0 %1078
        %1080 = vrot.lane.b32.xlu0 %v1028, 4
        %v1081 = vpop.permute.xlu0 %1080
        %1082 = vrot.lane.b32.xlu0 %v1029, 4
        %v1083 = vpop.permute.xlu0 %1082
        %1084 = vrot.lane.b32.xlu0 %v1030, 4
        %v1085 = vpop.permute.xlu0 %1084
        %1086 = vrot.lane.b32.xlu0 %v1031, 4
        %v1087 = vpop.permute.xlu0 %1086
        %1088 = vrot.lane.b32.xlu0 %v1032, 4
        %v1089 = vpop.permute.xlu0 %1088
        %1090 = vrot.lane.b32.xlu0 %v1033, 4
        %v1091 = vpop.permute.xlu0 %1090
        %1092 = vrot.lane.b32.xlu0 %v1034, 4
        %v1093 = vpop.permute.xlu0 %1092
        %1094 = vrot.lane.b32.xlu0 %v1035, 4
        %v1095 = vpop.permute.xlu0 %1094
        %1096 = vrot.lane.b32.xlu0 %v1036, 4
        %v1097 = vpop.permute.xlu0 %1096
        %1098 = vrot.lane.b32.xlu0 %v1037, 4
        %v1099 = vpop.permute.xlu0 %1098
        %1100 = vrot.lane.b32.xlu0 %v1038, 4
        %v1101 = vpop.permute.xlu0 %1100
        %1102 = vrot.lane.b32.xlu0 %v1039, 4
        %v1103 = vpop.permute.xlu0 %1102
        %1136 = vrot.lane.b32.xlu0 %v1040, 8
        %v1137 = vpop.permute.xlu0 %1136
        %1138 = vrot.lane.b32.xlu0 %v1041, 8
        %v1139 = vpop.permute.xlu0 %1138
        %1140 = vrot.lane.b32.xlu0 %v1042, 8
        %v1141 = vpop.permute.xlu0 %1140
        %1142 = vrot.lane.b32.xlu0 %v1043, 8
        %v1143 = vpop.permute.xlu0 %1142
        %1144 = vrot.lane.b32.xlu0 %v1044, 8
        %v1145 = vpop.permute.xlu0 %1144
        %1146 = vrot.lane.b32.xlu0 %v1045, 8
        %v1147 = vpop.permute.xlu0 %1146
        %1148 = vrot.lane.b32.xlu0 %v1046, 8
        %v1149 = vpop.permute.xlu0 %1148
        %1150 = vrot.lane.b32.xlu0 %v1047, 8
        %v1151 = vpop.permute.xlu0 %1150
        %1152 = vrot.lane.b32.xlu0 %v1048, 8
        %v1153 = vpop.permute.xlu0 %1152
        %1154 = vrot.lane.b32.xlu0 %v1049, 8
        %v1155 = vpop.permute.xlu0 %1154
        %1156 = vrot.lane.b32.xlu0 %v1050, 8
        %v1157 = vpop.permute.xlu0 %1156
        %1158 = vrot.lane.b32.xlu0 %v1051, 8
        %v1159 = vpop.permute.xlu0 %1158
        %1160 = vrot.lane.b32.xlu0 %v1052, 8
        %v1161 = vpop.permute.xlu0 %1160
        %1162 = vrot.lane.b32.xlu0 %v1053, 8
        %v1163 = vpop.permute.xlu0 %1162
        %1164 = vrot.lane.b32.xlu0 %v1054, 8
        %v1165 = vpop.permute.xlu0 %1164
        %1166 = vrot.lane.b32.xlu0 %v1055, 8
        %v1167 = vpop.permute.xlu0 %1166
        %v1184 = vsel %vm689, %v1008, %v1073
        %v1185 = vsel %vm689, %v1009, %v1075
        %v1186 = vsel %vm689, %v1010, %v1077
        %v1187 = vsel %vm689, %v1011, %v1079
        %v1188 = vsel %vm689, %v1012, %v1081
        %v1189 = vsel %vm689, %v1013, %v1083
        %v1190 = vsel %vm689, %v1014, %v1085
        %v1191 = vsel %vm689, %v1015, %v1087
        %v1192 = vsel %vm689, %v1016, %v1089
        %v1193 = vsel %vm689, %v1017, %v1091
        %v1194 = vsel %vm689, %v1018, %v1093
        %v1195 = vsel %vm689, %v1019, %v1095
        %v1196 = vsel %vm689, %v1020, %v1097
        %v1197 = vsel %vm689, %v1021, %v1099
        %v1198 = vsel %vm689, %v1022, %v1101
        %v1199 = vsel %vm689, %v1023, %v1103
        %vm1200 = vcmask 64512
        %v1201 = vsel %vm1200, %v1184, %v1137
        %v1202 = vsel %vm1200, %v1185, %v1139
        %v1203 = vsel %vm1200, %v1186, %v1141
        %v1204 = vsel %vm1200, %v1187, %v1143
        %v1205 = vsel %vm1200, %v1188, %v1145
        %v1206 = vsel %vm1200, %v1189, %v1147
        %v1207 = vsel %vm1200, %v1190, %v1149
        %v1208 = vsel %vm1200, %v1191, %v1151
        %v1209 = vsel %vm1200, %v1192, %v1153
        %v1210 = vsel %vm1200, %v1193, %v1155
        %v1211 = vsel %vm1200, %v1194, %v1157
        %v1212 = vsel %vm1200, %v1195, %v1159
        %v1213 = vsel %vm1200, %v1196, %v1161
        %v1214 = vsel %vm1200, %v1197, %v1163
        %v1215 = vsel %vm1200, %v1198, %v1165
        %v1216 = vsel %vm1200, %v1199, %v1167
        %v1217 = vld [vmem:[%s6] sm:$0xff]
        %v1218 = vld [vmem:[%s6 + $0x8] sm:$0xf]
        %v1219 = vld [vmem:[%s863] sm:$0xff]
        %v1220 = vld [vmem:[%s863 + $0x8] sm:$0xff]
        %v1221 = vld [vmem:[%s863 + $0x18] sm:$0xff]
        %v1222 = vld [vmem:[%s863 + $0x20] sm:$0xff]
        %v1223 = vld [vmem:[%s863 + $0x30] sm:$0xff]
        %v1224 = vld [vmem:[%s863 + $0x38] sm:$0xff]
        %v1225 = vld [vmem:[%s863 + $0x48] sm:$0xff]
        %v1226 = vld [vmem:[%s863 + $0x50] sm:$0xff]
        %v1227 = vld [vmem:[%s863 + $0x60] sm:$0xff]
        %v1228 = vld [vmem:[%s863 + $0x68] sm:$0xff]
        %v1229 = vld [vmem:[%s863 + $0x78] sm:$0xff]
        %v1230 = vld [vmem:[%s863 + $0x80] sm:$0xff]
        %v1231 = vld [vmem:[%s863 + $0x90] sm:$0xff]
        %v1232 = vld [vmem:[%s863 + $0x98] sm:$0xff]
        %v1233 = vld [vmem:[%s863 + $0xa8] sm:$0xff]
        %v1234 = vld [vmem:[%s863 + $0xb0] sm:$0xff]
        %v1235 = vld [vmem:[%s863 + $0x1] sm:$0xff]
        %v1236 = vld [vmem:[%s863 + $0x9] sm:$0xff]
        %v1237 = vld [vmem:[%s863 + $0x19] sm:$0xff]
        %v1238 = vld [vmem:[%s863 + $0x21] sm:$0xff]
        %v1239 = vld [vmem:[%s863 + $0x31] sm:$0xff]
        %v1240 = vld [vmem:[%s863 + $0x39] sm:$0xff]
        %v1241 = vld [vmem:[%s863 + $0x49] sm:$0xff]
        %v1242 = vld [vmem:[%s863 + $0x51] sm:$0xff]
        %v1243 = vld [vmem:[%s863 + $0x61] sm:$0xff]
        %v1244 = vld [vmem:[%s863 + $0x69] sm:$0xff]
        %v1245 = vld [vmem:[%s863 + $0x79] sm:$0xff]
        %v1246 = vld [vmem:[%s863 + $0x81] sm:$0xff]
        %v1247 = vld [vmem:[%s863 + $0x91] sm:$0xff]
        %v1248 = vld [vmem:[%s863 + $0x99] sm:$0xff]
        %v1249 = vld [vmem:[%s863 + $0xa9] sm:$0xff]
        %v1250 = vld [vmem:[%s863 + $0xb1] sm:$0xff]
        %v1251 = vld [vmem:[%s863 + $0x2] sm:$0xff]
        %v1252 = vld [vmem:[%s863 + $0xa] sm:$0xff]
        %v1253 = vld [vmem:[%s863 + $0x1a] sm:$0xff]
        %v1254 = vld [vmem:[%s863 + $0x22] sm:$0xff]
        %v1255 = vld [vmem:[%s863 + $0x32] sm:$0xff]
        %v1256 = vld [vmem:[%s863 + $0x3a] sm:$0xff]
        %v1257 = vld [vmem:[%s863 + $0x4a] sm:$0xff]
        %v1258 = vld [vmem:[%s863 + $0x52] sm:$0xff]
        %v1259 = vld [vmem:[%s863 + $0x62] sm:$0xff]
        %v1260 = vld [vmem:[%s863 + $0x6a] sm:$0xff]
        %v1261 = vld [vmem:[%s863 + $0x7a] sm:$0xff]
        %v1262 = vld [vmem:[%s863 + $0x82] sm:$0xff]
        %v1263 = vld [vmem:[%s863 + $0x92] sm:$0xff]
        %v1264 = vld [vmem:[%s863 + $0x9a] sm:$0xff]
        %v1265 = vld [vmem:[%s863 + $0xaa] sm:$0xff]
        %v1266 = vld [vmem:[%s863 + $0xb2] sm:$0xff]
        %1283 = vrot.lane.b32.xlu0 %v1235, 4
        %v1284 = vpop.permute.xlu0 %1283
        %1285 = vrot.lane.b32.xlu0 %v1236, 4
        %v1286 = vpop.permute.xlu0 %1285
        %1287 = vrot.lane.b32.xlu0 %v1237, 4
        %v1288 = vpop.permute.xlu0 %1287
        %1289 = vrot.lane.b32.xlu0 %v1238, 4
        %v1290 = vpop.permute.xlu0 %1289
        %1291 = vrot.lane.b32.xlu0 %v1239, 4
        %v1292 = vpop.permute.xlu0 %1291
        %1293 = vrot.lane.b32.xlu0 %v1240, 4
        %v1294 = vpop.permute.xlu0 %1293
        %1295 = vrot.lane.b32.xlu0 %v1241, 4
        %v1296 = vpop.permute.xlu0 %1295
        %1297 = vrot.lane.b32.xlu0 %v1242, 4
        %v1298 = vpop.permute.xlu0 %1297
        %1299 = vrot.lane.b32.xlu0 %v1243, 4
        %v1300 = vpop.permute.xlu0 %1299
        %1301 = vrot.lane.b32.xlu0 %v1244, 4
        %v1302 = vpop.permute.xlu0 %1301
        %1303 = vrot.lane.b32.xlu0 %v1245, 4
        %v1304 = vpop.permute.xlu0 %1303
        %1305 = vrot.lane.b32.xlu0 %v1246, 4
        %v1306 = vpop.permute.xlu0 %1305
        %1307 = vrot.lane.b32.xlu0 %v1247, 4
        %v1308 = vpop.permute.xlu0 %1307
        %1309 = vrot.lane.b32.xlu0 %v1248, 4
        %v1310 = vpop.permute.xlu0 %1309
        %1311 = vrot.lane.b32.xlu0 %v1249, 4
        %v1312 = vpop.permute.xlu0 %1311
        %1313 = vrot.lane.b32.xlu0 %v1250, 4
        %v1314 = vpop.permute.xlu0 %1313
        %1347 = vrot.lane.b32.xlu0 %v1251, 8
        %v1348 = vpop.permute.xlu0 %1347
        %1349 = vrot.lane.b32.xlu0 %v1252, 8
        %v1350 = vpop.permute.xlu0 %1349
        %1351 = vrot.lane.b32.xlu0 %v1253, 8
        %v1352 = vpop.permute.xlu0 %1351
        %1353 = vrot.lane.b32.xlu0 %v1254, 8
        %v1354 = vpop.permute.xlu0 %1353
        %1355 = vrot.lane.b32.xlu0 %v1255, 8
        %v1356 = vpop.permute.xlu0 %1355
        %1357 = vrot.lane.b32.xlu0 %v1256, 8
        %v1358 = vpop.permute.xlu0 %1357
        %1359 = vrot.lane.b32.xlu0 %v1257, 8
        %v1360 = vpop.permute.xlu0 %1359
        %1361 = vrot.lane.b32.xlu0 %v1258, 8
        %v1362 = vpop.permute.xlu0 %1361
        %1363 = vrot.lane.b32.xlu0 %v1259, 8
        %v1364 = vpop.permute.xlu0 %1363
        %1365 = vrot.lane.b32.xlu0 %v1260, 8
        %v1366 = vpop.permute.xlu0 %1365
        %1367 = vrot.lane.b32.xlu0 %v1261, 8
        %v1368 = vpop.permute.xlu0 %1367
        %1369 = vrot.lane.b32.xlu0 %v1262, 8
        %v1370 = vpop.permute.xlu0 %1369
        %1371 = vrot.lane.b32.xlu0 %v1263, 8
        %v1372 = vpop.permute.xlu0 %1371
        %1373 = vrot.lane.b32.xlu0 %v1264, 8
        %v1374 = vpop.permute.xlu0 %1373
        %1375 = vrot.lane.b32.xlu0 %v1265, 8
        %v1376 = vpop.permute.xlu0 %1375
        %1377 = vrot.lane.b32.xlu0 %v1266, 8
        %v1378 = vpop.permute.xlu0 %1377
        %v1395 = vsel %vm689, %v1219, %v1284
        %v1396 = vsel %vm689, %v1220, %v1286
        %v1397 = vsel %vm689, %v1221, %v1288
        %v1398 = vsel %vm689, %v1222, %v1290
        %v1399 = vsel %vm689, %v1223, %v1292
        %v1400 = vsel %vm689, %v1224, %v1294
        %v1401 = vsel %vm689, %v1225, %v1296
        %v1402 = vsel %vm689, %v1226, %v1298
        %v1403 = vsel %vm689, %v1227, %v1300
        %v1404 = vsel %vm689, %v1228, %v1302
        %v1405 = vsel %vm689, %v1229, %v1304
        %v1406 = vsel %vm689, %v1230, %v1306
        %v1407 = vsel %vm689, %v1231, %v1308
        %v1408 = vsel %vm689, %v1232, %v1310
        %v1409 = vsel %vm689, %v1233, %v1312
        %v1410 = vsel %vm689, %v1234, %v1314
        %v1411 = vsel %vm1200, %v1395, %v1348
        %v1412 = vsel %vm1200, %v1396, %v1350
        %v1413 = vsel %vm1200, %v1397, %v1352
        %v1414 = vsel %vm1200, %v1398, %v1354
        %v1415 = vsel %vm1200, %v1399, %v1356
        %v1416 = vsel %vm1200, %v1400, %v1358
        %v1417 = vsel %vm1200, %v1401, %v1360
        %v1418 = vsel %vm1200, %v1402, %v1362
        %v1419 = vsel %vm1200, %v1403, %v1364
        %v1420 = vsel %vm1200, %v1404, %v1366
        %v1421 = vsel %vm1200, %v1405, %v1368
        %v1422 = vsel %vm1200, %v1406, %v1370
        %v1423 = vsel %vm1200, %v1407, %v1372
        %v1424 = vsel %vm1200, %v1408, %v1374
        %v1425 = vsel %vm1200, %v1409, %v1376
        %v1426 = vsel %vm1200, %v1410, %v1378
        %s1427 = scalar_lea.vmem %s6, 16
        %v1428 = vld [vmem:[%s1427] sm:$0xff]
        %v1429 = vld [vmem:[%s1427 + $0x8] sm:$0xf]
        %vm1430 = vcmask 97280
        %v1432 = vsel %vm1430, %v1411, 0
        %v1435 = vsel %vm1430, %v1412, 0
        %v1438 = vsel %vm1430, %v1413, 0
        %v1441 = vsel %vm1430, %v1414, 0
        %v1444 = vsel %vm1430, %v1415, 0
        %v1447 = vsel %vm1430, %v1416, 0
        %v1450 = vsel %vm1430, %v1417, 0
        %v1453 = vsel %vm1430, %v1418, 0
        %v1456 = vsel %vm1430, %v1419, 0
        %v1459 = vsel %vm1430, %v1420, 0
        %v1462 = vsel %vm1430, %v1421, 0
        %v1465 = vsel %vm1430, %v1422, 0
        %v1468 = vsel %vm1430, %v1423, 0
        %v1471 = vsel %vm1430, %v1424, 0
        %v1474 = vsel %vm1430, %v1425, 0
        %v1477 = vsel %vm1430, %v1426, 0
        %v1480 = vsel %vm738, %v1429, 0
        %1482 = vmatpush.msra.mxu0 0.0
        %1483 = vmatpush.msra.mxu0 0.0
        %1484 = vmatpush.msra.mxu0 0.0
        %1485 = vmatpush.msra.mxu0 0.0
        %1486 = vmatpush.msra.mxu0 0.0
        %1487 = vmatpush.msra.mxu0 0.0
        %1488 = vmatpush.msra.mxu0 0.0
        %1489 = vmatpush.msra.mxu0 0.0
        %1490 = vmatpush.msra.mxu0 0.0
        %1491 = vmatpush.msra.mxu0 0.0
        %1492 = vmatpush.msra.mxu0 0.0
        %1493 = vmatpush.msra.mxu0 0.0
        %1494 = vmatpush.msra.mxu0 0.0
        %1495 = vmatpush.msra.mxu0 0.0
        %1496 = vmatpush.msra.mxu0 %v1480
        %1497 = vmatpush.msra.mxu0 %v1428
        %1498 = vmatmul.f32.gmra.mxu0 %v1432
        %v1499 = vpop.f32.mrf.mxu0
        %v1500 = vadd.f32 0.0, %v1499
        %1501 = vmatmul.f32.gmra.mxu0 %v1435
        %v1502 = vpop.f32.mrf.mxu0
        %v1503 = vadd.f32 0.0, %v1502
        %1504 = vmatmul.f32.gmra.mxu0 %v1438
        %v1505 = vpop.f32.mrf.mxu0
        %v1506 = vadd.f32 0.0, %v1505
        %1507 = vmatmul.f32.gmra.mxu0 %v1441
        %v1508 = vpop.f32.mrf.mxu0
        %v1509 = vadd.f32 0.0, %v1508
        %1510 = vmatmul.f32.gmra.mxu0 %v1444
        %v1511 = vpop.f32.mrf.mxu0
        %v1512 = vadd.f32 0.0, %v1511
        %1513 = vmatmul.f32.gmra.mxu0 %v1447
        %v1514 = vpop.f32.mrf.mxu0
        %v1515 = vadd.f32 0.0, %v1514
        %1516 = vmatmul.f32.gmra.mxu0 %v1450
        %v1517 = vpop.f32.mrf.mxu0
        %v1518 = vadd.f32 0.0, %v1517
        %1519 = vmatmul.f32.gmra.mxu0 %v1453
        %v1520 = vpop.f32.mrf.mxu0
        %v1521 = vadd.f32 0.0, %v1520
        %1522 = vmatmul.f32.gmra.mxu0 %v1456
        %v1523 = vpop.f32.mrf.mxu0
        %v1524 = vadd.f32 0.0, %v1523
        %1525 = vmatmul.f32.gmra.mxu0 %v1459
        %v1526 = vpop.f32.mrf.mxu0
        %v1527 = vadd.f32 0.0, %v1526
        %1528 = vmatmul.f32.gmra.mxu0 %v1462
        %v1529 = vpop.f32.mrf.mxu0
        %v1530 = vadd.f32 0.0, %v1529
        %1531 = vmatmul.f32.gmra.mxu0 %v1465
        %v1532 = vpop.f32.mrf.mxu0
        %v1533 = vadd.f32 0.0, %v1532
        %1534 = vmatmul.f32.gmra.mxu0 %v1468
        %v1535 = vpop.f32.mrf.mxu0
        %v1536 = vadd.f32 0.0, %v1535
        %1537 = vmatmul.f32.gmra.mxu0 %v1471
        %v1538 = vpop.f32.mrf.mxu0
        %v1539 = vadd.f32 0.0, %v1538
        %1540 = vmatmul.f32.gmra.mxu0 %v1474
        %v1541 = vpop.f32.mrf.mxu0
        %v1542 = vadd.f32 0.0, %v1541
        %1543 = vmatmul.f32.gmra.mxu0 %v1477
        %v1544 = vpop.f32.mrf.mxu0
        %v1545 = vadd.f32 0.0, %v1544
        %1546 = vdwg.mxu0
        %v1548 = vsel %vm1430, %v1201, 0
        %v1551 = vsel %vm1430, %v1202, 0
        %v1554 = vsel %vm1430, %v1203, 0
        %v1557 = vsel %vm1430, %v1204, 0
        %v1560 = vsel %vm1430, %v1205, 0
        %v1563 = vsel %vm1430, %v1206, 0
        %v1566 = vsel %vm1430, %v1207, 0
        %v1569 = vsel %vm1430, %v1208, 0
        %v1572 = vsel %vm1430, %v1209, 0
        %v1575 = vsel %vm1430, %v1210, 0
        %v1578 = vsel %vm1430, %v1211, 0
        %v1581 = vsel %vm1430, %v1212, 0
        %v1584 = vsel %vm1430, %v1213, 0
        %v1587 = vsel %vm1430, %v1214, 0
        %v1590 = vsel %vm1430, %v1215, 0
        %v1593 = vsel %vm1430, %v1216, 0
        %v1596 = vsel %vm738, %v1218, 0
        %1598 = vmatpush.msra.mxu0 0.0
        %1599 = vmatpush.msra.mxu0 0.0
        %1600 = vmatpush.msra.mxu0 0.0
        %1601 = vmatpush.msra.mxu0 0.0
        %1602 = vmatpush.msra.mxu0 0.0
        %1603 = vmatpush.msra.mxu0 0.0
        %1604 = vmatpush.msra.mxu0 0.0
        %1605 = vmatpush.msra.mxu0 0.0
        %1606 = vmatpush.msra.mxu0 0.0
        %1607 = vmatpush.msra.mxu0 0.0
        %1608 = vmatpush.msra.mxu0 0.0
        %1609 = vmatpush.msra.mxu0 0.0
        %1610 = vmatpush.msra.mxu0 0.0
        %1611 = vmatpush.msra.mxu0 0.0
        %1612 = vmatpush.msra.mxu0 %v1596
        %1613 = vmatpush.msra.mxu0 %v1217
        %1614 = vmatmul.f32.gmra.mxu0 %v1548
        %v1615 = vpop.f32.mrf.mxu0
        %v1616 = vadd.f32 %v1500, %v1615
        %1617 = vmatmul.f32.gmra.mxu0 %v1551
        %v1618 = vpop.f32.mrf.mxu0
        %v1619 = vadd.f32 %v1503, %v1618
        %1620 = vmatmul.f32.gmra.mxu0 %v1554
        %v1621 = vpop.f32.mrf.mxu0
        %v1622 = vadd.f32 %v1506, %v1621
        %1623 = vmatmul.f32.gmra.mxu0 %v1557
        %v1624 = vpop.f32.mrf.mxu0
        %v1625 = vadd.f32 %v1509, %v1624
        %1626 = vmatmul.f32.gmra.mxu0 %v1560
        %v1627 = vpop.f32.mrf.mxu0
        %v1628 = vadd.f32 %v1512, %v1627
        %1629 = vmatmul.f32.gmra.mxu0 %v1563
        %v1630 = vpop.f32.mrf.mxu0
        %v1631 = vadd.f32 %v1515, %v1630
        %1632 = vmatmul.f32.gmra.mxu0 %v1566
        %v1633 = vpop.f32.mrf.mxu0
        %v1634 = vadd.f32 %v1518, %v1633
        %1635 = vmatmul.f32.gmra.mxu0 %v1569
        %v1636 = vpop.f32.mrf.mxu0
        %v1637 = vadd.f32 %v1521, %v1636
        %1638 = vmatmul.f32.gmra.mxu0 %v1572
        %v1639 = vpop.f32.mrf.mxu0
        %v1640 = vadd.f32 %v1524, %v1639
        %1641 = vmatmul.f32.gmra.mxu0 %v1575
        %v1642 = vpop.f32.mrf.mxu0
        %v1643 = vadd.f32 %v1527, %v1642
        %1644 = vmatmul.f32.gmra.mxu0 %v1578
        %v1645 = vpop.f32.mrf.mxu0
        %v1646 = vadd.f32 %v1530, %v1645
        %1647 = vmatmul.f32.gmra.mxu0 %v1581
        %v1648 = vpop.f32.mrf.mxu0
        %v1649 = vadd.f32 %v1533, %v1648
        %1650 = vmatmul.f32.gmra.mxu0 %v1584
        %v1651 = vpop.f32.mrf.mxu0
        %v1652 = vadd.f32 %v1536, %v1651
        %1653 = vmatmul.f32.gmra.mxu0 %v1587
        %v1654 = vpop.f32.mrf.mxu0
        %v1655 = vadd.f32 %v1539, %v1654
        %1656 = vmatmul.f32.gmra.mxu0 %v1590
        %v1657 = vpop.f32.mrf.mxu0
        %v1658 = vadd.f32 %v1542, %v1657
        %1659 = vmatmul.f32.gmra.mxu0 %v1593
        %v1660 = vpop.f32.mrf.mxu0
        %v1661 = vadd.f32 %v1545, %v1660
        %1662 = vdwg.mxu0
        %s1663 = scalar_lea.vmem [#allocation2], 48
        %v1664 = vld [vmem:[%s1663] sm:$0xff]
        %v1665 = vld [vmem:[%s1663 + $0x8] sm:$0xff]
        %v1666 = vld [vmem:[%s1663 + $0x18] sm:$0xff]
        %v1667 = vld [vmem:[%s1663 + $0x20] sm:$0xff]
        %v1668 = vld [vmem:[%s1663 + $0x30] sm:$0xff]
        %v1669 = vld [vmem:[%s1663 + $0x38] sm:$0xff]
        %v1670 = vld [vmem:[%s1663 + $0x48] sm:$0xff]
        %v1671 = vld [vmem:[%s1663 + $0x50] sm:$0xff]
        %v1672 = vld [vmem:[%s1663 + $0x60] sm:$0xff]
        %v1673 = vld [vmem:[%s1663 + $0x68] sm:$0xff]
        %v1674 = vld [vmem:[%s1663 + $0x78] sm:$0xff]
        %v1675 = vld [vmem:[%s1663 + $0x80] sm:$0xff]
        %v1676 = vld [vmem:[%s1663 + $0x90] sm:$0xff]
        %v1677 = vld [vmem:[%s1663 + $0x98] sm:$0xff]
        %v1678 = vld [vmem:[%s1663 + $0xa8] sm:$0xff]
        %v1679 = vld [vmem:[%s1663 + $0xb0] sm:$0xff]
        %v1680 = vld [vmem:[%s1663 + $0x1] sm:$0xff]
        %v1681 = vld [vmem:[%s1663 + $0x9] sm:$0xff]
        %v1682 = vld [vmem:[%s1663 + $0x19] sm:$0xff]
        %v1683 = vld [vmem:[%s1663 + $0x21] sm:$0xff]
        %v1684 = vld [vmem:[%s1663 + $0x31] sm:$0xff]
        %v1685 = vld [vmem:[%s1663 + $0x39] sm:$0xff]
        %v1686 = vld [vmem:[%s1663 + $0x49] sm:$0xff]
        %v1687 = vld [vmem:[%s1663 + $0x51] sm:$0xff]
        %v1688 = vld [vmem:[%s1663 + $0x61] sm:$0xff]
        %v1689 = vld [vmem:[%s1663 + $0x69] sm:$0xff]
        %v1690 = vld [vmem:[%s1663 + $0x79] sm:$0xff]
        %v1691 = vld [vmem:[%s1663 + $0x81] sm:$0xff]
        %v1692 = vld [vmem:[%s1663 + $0x91] sm:$0xff]
        %v1693 = vld [vmem:[%s1663 + $0x99] sm:$0xff]
        %v1694 = vld [vmem:[%s1663 + $0xa9] sm:$0xff]
        %v1695 = vld [vmem:[%s1663 + $0xb1] sm:$0xff]
        %v1696 = vld [vmem:[%s1663 + $0x2] sm:$0xff]
        %v1697 = vld [vmem:[%s1663 + $0xa] sm:$0xff]
        %v1698 = vld [vmem:[%s1663 + $0x1a] sm:$0xff]
        %v1699 = vld [vmem:[%s1663 + $0x22] sm:$0xff]
        %v1700 = vld [vmem:[%s1663 + $0x32] sm:$0xff]
        %v1701 = vld [vmem:[%s1663 + $0x3a] sm:$0xff]
        %v1702 = vld [vmem:[%s1663 + $0x4a] sm:$0xff]
        %v1703 = vld [vmem:[%s1663 + $0x52] sm:$0xff]
        %v1704 = vld [vmem:[%s1663 + $0x62] sm:$0xff]
        %v1705 = vld [vmem:[%s1663 + $0x6a] sm:$0xff]
        %v1706 = vld [vmem:[%s1663 + $0x7a] sm:$0xff]
        %v1707 = vld [vmem:[%s1663 + $0x82] sm:$0xff]
        %v1708 = vld [vmem:[%s1663 + $0x92] sm:$0xff]
        %v1709 = vld [vmem:[%s1663 + $0x9a] sm:$0xff]
        %v1710 = vld [vmem:[%s1663 + $0xaa] sm:$0xff]
        %v1711 = vld [vmem:[%s1663 + $0xb2] sm:$0xff]
        %1728 = vrot.lane.b32.xlu0 %v1680, 4
        %v1729 = vpop.permute.xlu0 %1728
        %1730 = vrot.lane.b32.xlu0 %v1681, 4
        %v1731 = vpop.permute.xlu0 %1730
        %1732 = vrot.lane.b32.xlu0 %v1682, 4
        %v1733 = vpop.permute.xlu0 %1732
        %1734 = vrot.lane.b32.xlu0 %v1683, 4
        %v1735 = vpop.permute.xlu0 %1734
        %1736 = vrot.lane.b32.xlu0 %v1684, 4
        %v1737 = vpop.permute.xlu0 %1736
        %1738 = vrot.lane.b32.xlu0 %v1685, 4
        %v1739 = vpop.permute.xlu0 %1738
        %1740 = vrot.lane.b32.xlu0 %v1686, 4
        %v1741 = vpop.permute.xlu0 %1740
        %1742 = vrot.lane.b32.xlu0 %v1687, 4
        %v1743 = vpop.permute.xlu0 %1742
        %1744 = vrot.lane.b32.xlu0 %v1688, 4
        %v1745 = vpop.permute.xlu0 %1744
        %1746 = vrot.lane.b32.xlu0 %v1689, 4
        %v1747 = vpop.permute.xlu0 %1746
        %1748 = vrot.lane.b32.xlu0 %v1690, 4
        %v1749 = vpop.permute.xlu0 %1748
        %1750 = vrot.lane.b32.xlu0 %v1691, 4
        %v1751 = vpop.permute.xlu0 %1750
        %1752 = vrot.lane.b32.xlu0 %v1692, 4
        %v1753 = vpop.permute.xlu0 %1752
        %1754 = vrot.lane.b32.xlu0 %v1693, 4
        %v1755 = vpop.permute.xlu0 %1754
        %1756 = vrot.lane.b32.xlu0 %v1694, 4
        %v1757 = vpop.permute.xlu0 %1756
        %1758 = vrot.lane.b32.xlu0 %v1695, 4
        %v1759 = vpop.permute.xlu0 %1758
        %1792 = vrot.lane.b32.xlu0 %v1696, 8
        %v1793 = vpop.permute.xlu0 %1792
        %1794 = vrot.lane.b32.xlu0 %v1697, 8
        %v1795 = vpop.permute.xlu0 %1794
        %1796 = vrot.lane.b32.xlu0 %v1698, 8
        %v1797 = vpop.permute.xlu0 %1796
        %1798 = vrot.lane.b32.xlu0 %v1699, 8
        %v1799 = vpop.permute.xlu0 %1798
        %1800 = vrot.lane.b32.xlu0 %v1700, 8
        %v1801 = vpop.permute.xlu0 %1800
        %1802 = vrot.lane.b32.xlu0 %v1701, 8
        %v1803 = vpop.permute.xlu0 %1802
        %1804 = vrot.lane.b32.xlu0 %v1702, 8
        %v1805 = vpop.permute.xlu0 %1804
        %1806 = vrot.lane.b32.xlu0 %v1703, 8
        %v1807 = vpop.permute.xlu0 %1806
        %1808 = vrot.lane.b32.xlu0 %v1704, 8
        %v1809 = vpop.permute.xlu0 %1808
        %1810 = vrot.lane.b32.xlu0 %v1705, 8
        %v1811 = vpop.permute.xlu0 %1810
        %1812 = vrot.lane.b32.xlu0 %v1706, 8
        %v1813 = vpop.permute.xlu0 %1812
        %1814 = vrot.lane.b32.xlu0 %v1707, 8
        %v1815 = vpop.permute.xlu0 %1814
        %1816 = vrot.lane.b32.xlu0 %v1708, 8
        %v1817 = vpop.permute.xlu0 %1816
        %1818 = vrot.lane.b32.xlu0 %v1709, 8
        %v1819 = vpop.permute.xlu0 %1818
        %1820 = vrot.lane.b32.xlu0 %v1710, 8
        %v1821 = vpop.permute.xlu0 %1820
        %1822 = vrot.lane.b32.xlu0 %v1711, 8
        %v1823 = vpop.permute.xlu0 %1822
        %v1840 = vsel %vm689, %v1664, %v1729
        %v1841 = vsel %vm689, %v1665, %v1731
        %v1842 = vsel %vm689, %v1666, %v1733
        %v1843 = vsel %vm689, %v1667, %v1735
        %v1844 = vsel %vm689, %v1668, %v1737
        %v1845 = vsel %vm689, %v1669, %v1739
        %v1846 = vsel %vm689, %v1670, %v1741
        %v1847 = vsel %vm689, %v1671, %v1743
        %v1848 = vsel %vm689, %v1672, %v1745
        %v1849 = vsel %vm689, %v1673, %v1747
        %v1850 = vsel %vm689, %v1674, %v1749
        %v1851 = vsel %vm689, %v1675, %v1751
        %v1852 = vsel %vm689, %v1676, %v1753
        %v1853 = vsel %vm689, %v1677, %v1755
        %v1854 = vsel %vm689, %v1678, %v1757
        %v1855 = vsel %vm689, %v1679, %v1759
        %v1856 = vsel %vm1200, %v1840, %v1793
        %v1857 = vsel %vm1200, %v1841, %v1795
        %v1858 = vsel %vm1200, %v1842, %v1797
        %v1859 = vsel %vm1200, %v1843, %v1799
        %v1860 = vsel %vm1200, %v1844, %v1801
        %v1861 = vsel %vm1200, %v1845, %v1803
        %v1862 = vsel %vm1200, %v1846, %v1805
        %v1863 = vsel %vm1200, %v1847, %v1807
        %v1864 = vsel %vm1200, %v1848, %v1809
        %v1865 = vsel %vm1200, %v1849, %v1811
        %v1866 = vsel %vm1200, %v1850, %v1813
        %v1867 = vsel %vm1200, %v1851, %v1815
        %v1868 = vsel %vm1200, %v1852, %v1817
        %v1869 = vsel %vm1200, %v1853, %v1819
        %v1870 = vsel %vm1200, %v1854, %v1821
        %v1871 = vsel %vm1200, %v1855, %v1823
        %s1872 = scalar_lea.vmem %s6, 32
        %v1873 = vld [vmem:[%s1872] sm:$0xff]
        %v1874 = vld [vmem:[%s1872 + $0x8] sm:$0xf]
        %v1876 = vsel %vm1430, %v1856, 0
        %v1879 = vsel %vm1430, %v1857, 0
        %v1882 = vsel %vm1430, %v1858, 0
        %v1885 = vsel %vm1430, %v1859, 0
        %v1888 = vsel %vm1430, %v1860, 0
        %v1891 = vsel %vm1430, %v1861, 0
        %v1894 = vsel %vm1430, %v1862, 0
        %v1897 = vsel %vm1430, %v1863, 0
        %v1900 = vsel %vm1430, %v1864, 0
        %v1903 = vsel %vm1430, %v1865, 0
        %v1906 = vsel %vm1430, %v1866, 0
        %v1909 = vsel %vm1430, %v1867, 0
        %v1912 = vsel %vm1430, %v1868, 0
        %v1915 = vsel %vm1430, %v1869, 0
        %v1918 = vsel %vm1430, %v1870, 0
        %v1921 = vsel %vm1430, %v1871, 0
        %v1924 = vsel %vm738, %v1874, 0
        %1926 = vmatpush.msra.mxu0 0.0
        %1927 = vmatpush.msra.mxu0 0.0
        %1928 = vmatpush.msra.mxu0 0.0
        %1929 = vmatpush.msra.mxu0 0.0
        %1930 = vmatpush.msra.mxu0 0.0
        %1931 = vmatpush.msra.mxu0 0.0
        %1932 = vmatpush.msra.mxu0 0.0
        %1933 = vmatpush.msra.mxu0 0.0
        %1934 = vmatpush.msra.mxu0 0.0
        %1935 = vmatpush.msra.mxu0 0.0
        %1936 = vmatpush.msra.mxu0 0.0
        %1937 = vmatpush.msra.mxu0 0.0
        %1938 = vmatpush.msra.mxu0 0.0
        %1939 = vmatpush.msra.mxu0 0.0
        %1940 = vmatpush.msra.mxu0 %v1924
        %1941 = vmatpush.msra.mxu0 %v1873
        %1942 = vmatmul.f32.gmra.mxu0 %v1876
        %v1943 = vpop.f32.mrf.mxu0
        %v1944 = vadd.f32 0.0, %v1943
        %1945 = vmatmul.f32.gmra.mxu0 %v1879
        %v1946 = vpop.f32.mrf.mxu0
        %v1947 = vadd.f32 0.0, %v1946
        %1948 = vmatmul.f32.gmra.mxu0 %v1882
        %v1949 = vpop.f32.mrf.mxu0
        %v1950 = vadd.f32 0.0, %v1949
        %1951 = vmatmul.f32.gmra.mxu0 %v1885
        %v1952 = vpop.f32.mrf.mxu0
        %v1953 = vadd.f32 0.0, %v1952
        %1954 = vmatmul.f32.gmra.mxu0 %v1888
        %v1955 = vpop.f32.mrf.mxu0
        %v1956 = vadd.f32 0.0, %v1955
        %1957 = vmatmul.f32.gmra.mxu0 %v1891
        %v1958 = vpop.f32.mrf.mxu0
        %v1959 = vadd.f32 0.0, %v1958
        %1960 = vmatmul.f32.gmra.mxu0 %v1894
        %v1961 = vpop.f32.mrf.mxu0
        %v1962 = vadd.f32 0.0, %v1961
        %1963 = vmatmul.f32.gmra.mxu0 %v1897
        %v1964 = vpop.f32.mrf.mxu0
        %v1965 = vadd.f32 0.0, %v1964
        %1966 = vmatmul.f32.gmra.mxu0 %v1900
        %v1967 = vpop.f32.mrf.mxu0
        %v1968 = vadd.f32 0.0, %v1967
        %1969 = vmatmul.f32.gmra.mxu0 %v1903
        %v1970 = vpop.f32.mrf.mxu0
        %v1971 = vadd.f32 0.0, %v1970
        %1972 = vmatmul.f32.gmra.mxu0 %v1906
        %v1973 = vpop.f32.mrf.mxu0
        %v1974 = vadd.f32 0.0, %v1973
        %1975 = vmatmul.f32.gmra.mxu0 %v1909
        %v1976 = vpop.f32.mrf.mxu0
        %v1977 = vadd.f32 0.0, %v1976
        %1978 = vmatmul.f32.gmra.mxu0 %v1912
        %v1979 = vpop.f32.mrf.mxu0
        %v1980 = vadd.f32 0.0, %v1979
        %1981 = vmatmul.f32.gmra.mxu0 %v1915
        %v1982 = vpop.f32.mrf.mxu0
        %v1983 = vadd.f32 0.0, %v1982
        %1984 = vmatmul.f32.gmra.mxu0 %v1918
        %v1985 = vpop.f32.mrf.mxu0
        %v1986 = vadd.f32 0.0, %v1985
        %1987 = vmatmul.f32.gmra.mxu0 %v1921
        %v1988 = vpop.f32.mrf.mxu0
        %v1989 = vadd.f32 0.0, %v1988
        %1990 = vdwg.mxu0
        %v1991 = vadd.f32 %v1616, %v1944
        %v1992 = vadd.f32 %v1619, %v1947
        %v1993 = vadd.f32 %v1622, %v1950
        %v1994 = vadd.f32 %v1625, %v1953
        %v1995 = vadd.f32 %v1628, %v1956
        %v1996 = vadd.f32 %v1631, %v1959
        %v1997 = vadd.f32 %v1634, %v1962
        %v1998 = vadd.f32 %v1637, %v1965
        %v1999 = vadd.f32 %v1640, %v1968
        %v2000 = vadd.f32 %v1643, %v1971
        %v2001 = vadd.f32 %v1646, %v1974
        %v2002 = vadd.f32 %v1649, %v1977
        %v2003 = vadd.f32 %v1652, %v1980
        %v2004 = vadd.f32 %v1655, %v1983
        %v2005 = vadd.f32 %v1658, %v1986
        %v2006 = vadd.f32 %v1661, %v1989
        %v2007 = vld [vmem:[%s7] sm:$0x1]
        %v2009 = vperm.slane %v2007, 0
        %v2011 = vmul.f32 %v1991, %v2009
        %v2012 = vmul.f32 %v1992, %v2009
        %v2013 = vmul.f32 %v1993, %v2009
        %v2014 = vmul.f32 %v1994, %v2009
        %v2015 = vmul.f32 %v1995, %v2009
        %v2016 = vmul.f32 %v1996, %v2009
        %v2017 = vmul.f32 %v1997, %v2009
        %v2018 = vmul.f32 %v1998, %v2009
        %v2019 = vmul.f32 %v1999, %v2009
        %v2020 = vmul.f32 %v2000, %v2009
        %v2021 = vmul.f32 %v2001, %v2009
        %v2022 = vmul.f32 %v2002, %v2009
        %v2023 = vmul.f32 %v2003, %v2009
        %v2024 = vmul.f32 %v2004, %v2009
        %v2025 = vmul.f32 %v2005, %v2009
        %v2026 = vmul.f32 %v2006, %v2009
        %v2027 = vld [vmem:[%s8] sm:$0x1]
        %v2029 = vperm.slane %v2027, 0
        %v2031 = vadd.f32 %v2011, %v2029
        %v2032 = vadd.f32 %v2012, %v2029
        %v2033 = vadd.f32 %v2013, %v2029
        %v2034 = vadd.f32 %v2014, %v2029
        %v2035 = vadd.f32 %v2015, %v2029
        %v2036 = vadd.f32 %v2016, %v2029
        %v2037 = vadd.f32 %v2017, %v2029
        %v2038 = vadd.f32 %v2018, %v2029
        %v2039 = vadd.f32 %v2019, %v2029
        %v2040 = vadd.f32 %v2020, %v2029
        %v2041 = vadd.f32 %v2021, %v2029
        %v2042 = vadd.f32 %v2022, %v2029
        %v2043 = vadd.f32 %v2023, %v2029
        %v2044 = vadd.f32 %v2024, %v2029
        %v2045 = vadd.f32 %v2025, %v2029
        %v2046 = vadd.f32 %v2026, %v2029
        %v2047 = vmax.f32 %v2031, 0.0
        %v2048 = vmax.f32 %v2032, 0.0
        %v2049 = vmax.f32 %v2033, 0.0
        %v2050 = vmax.f32 %v2034, 0.0
        %v2051 = vmax.f32 %v2035, 0.0
        %v2052 = vmax.f32 %v2036, 0.0
        %v2053 = vmax.f32 %v2037, 0.0
        %v2054 = vmax.f32 %v2038, 0.0
        %v2055 = vmax.f32 %v2039, 0.0
        %v2056 = vmax.f32 %v2040, 0.0
        %v2057 = vmax.f32 %v2041, 0.0
        %v2058 = vmax.f32 %v2042, 0.0
        %v2059 = vmax.f32 %v2043, 0.0
        %v2060 = vmax.f32 %v2044, 0.0
        %v2061 = vmax.f32 %v2045, 0.0
        %v2062 = vmax.f32 %v2046, 0.0
        %v2063 = vld [vmem:[%s9] sm:$0xf]
        %v2065 = vsel %vm689, %v2047, 0
        %v2068 = vsel %vm689, %v2048, 0
        %v2071 = vsel %vm689, %v2049, 0
        %v2074 = vsel %vm689, %v2050, 0
        %v2077 = vsel %vm689, %v2051, 0
        %v2080 = vsel %vm689, %v2052, 0
        %v2083 = vsel %vm689, %v2053, 0
        %v2086 = vsel %vm689, %v2054, 0
        %v2089 = vsel %vm689, %v2055, 0
        %v2092 = vsel %vm689, %v2056, 0
        %v2095 = vsel %vm689, %v2057, 0
        %v2098 = vsel %vm689, %v2058, 0
        %v2101 = vsel %vm689, %v2059, 0
        %v2104 = vsel %vm689, %v2060, 0
        %v2107 = vsel %vm689, %v2061, 0
        %v2110 = vsel %vm689, %v2062, 0
        %v2113 = vsel %vm738, %v2063, 0
        %2115 = vmatpush.msra.mxu0 0.0
        %2116 = vmatpush.msra.mxu0 0.0
        %2117 = vmatpush.msra.mxu0 0.0
        %2118 = vmatpush.msra.mxu0 0.0
        %2119 = vmatpush.msra.mxu0 0.0
        %2120 = vmatpush.msra.mxu0 0.0
        %2121 = vmatpush.msra.mxu0 0.0
        %2122 = vmatpush.msra.mxu0 0.0
        %2123 = vmatpush.msra.mxu0 0.0
        %2124 = vmatpush.msra.mxu0 0.0
        %2125 = vmatpush.msra.mxu0 0.0
        %2126 = vmatpush.msra.mxu0 0.0
        %2127 = vmatpush.msra.mxu0 0.0
        %2128 = vmatpush.msra.mxu0 0.0
        %2129 = vmatpush.msra.mxu0 0.0
        %2130 = vmatpush.msra.mxu0 %v2113
        %2131 = vmatmul.f32.gmra.mxu0 %v2065
        %v2132 = vpop.f32.mrf.mxu0
        %v2133 = vadd.f32 0.0, %v2132
        %2134 = vmatmul.f32.gmra.mxu0 %v2068
        %v2135 = vpop.f32.mrf.mxu0
        %v2136 = vadd.f32 0.0, %v2135
        %2137 = vmatmul.f32.gmra.mxu0 %v2071
        %v2138 = vpop.f32.mrf.mxu0
        %v2139 = vadd.f32 0.0, %v2138
        %2140 = vmatmul.f32.gmra.mxu0 %v2074
        %v2141 = vpop.f32.mrf.mxu0
        %v2142 = vadd.f32 0.0, %v2141
        %2143 = vmatmul.f32.gmra.mxu0 %v2077
        %v2144 = vpop.f32.mrf.mxu0
        %v2145 = vadd.f32 0.0, %v2144
        %2146 = vmatmul.f32.gmra.mxu0 %v2080
        %v2147 = vpop.f32.mrf.mxu0
        %v2148 = vadd.f32 0.0, %v2147
        %2149 = vmatmul.f32.gmra.mxu0 %v2083
        %v2150 = vpop.f32.mrf.mxu0
        %v2151 = vadd.f32 0.0, %v2150
        %2152 = vmatmul.f32.gmra.mxu0 %v2086
        %v2153 = vpop.f32.mrf.mxu0
        %v2154 = vadd.f32 0.0, %v2153
        %2155 = vmatmul.f32.gmra.mxu0 %v2089
        %v2156 = vpop.f32.mrf.mxu0
        %v2157 = vadd.f32 0.0, %v2156
        %2158 = vmatmul.f32.gmra.mxu0 %v2092
        %v2159 = vpop.f32.mrf.mxu0
        %v2160 = vadd.f32 0.0, %v2159
        %2161 = vmatmul.f32.gmra.mxu0 %v2095
        %v2162 = vpop.f32.mrf.mxu0
        %v2163 = vadd.f32 0.0, %v2162
        %2164 = vmatmul.f32.gmra.mxu0 %v2098
        %v2165 = vpop.f32.mrf.mxu0
        %v2166 = vadd.f32 0.0, %v2165
        %2167 = vmatmul.f32.gmra.mxu0 %v2101
        %v2168 = vpop.f32.mrf.mxu0
        %v2169 = vadd.f32 0.0, %v2168
        %2170 = vmatmul.f32.gmra.mxu0 %v2104
        %v2171 = vpop.f32.mrf.mxu0
        %v2172 = vadd.f32 0.0, %v2171
        %2173 = vmatmul.f32.gmra.mxu0 %v2107
        %v2174 = vpop.f32.mrf.mxu0
        %v2175 = vadd.f32 0.0, %v2174
        %2176 = vmatmul.f32.gmra.mxu0 %v2110
        %v2177 = vpop.f32.mrf.mxu0
        %v2178 = vadd.f32 0.0, %v2177
        %2179 = vdwg.mxu0
        %v2180 = vld [vmem:[%s10] sm:$0x1]
        %v2182 = vperm.slane %v2180, 0
        %v2184 = vmul.f32 %v2133, %v2182
        %v2185 = vmul.f32 %v2136, %v2182
        %v2186 = vmul.f32 %v2139, %v2182
        %v2187 = vmul.f32 %v2142, %v2182
        %v2188 = vmul.f32 %v2145, %v2182
        %v2189 = vmul.f32 %v2148, %v2182
        %v2190 = vmul.f32 %v2151, %v2182
        %v2191 = vmul.f32 %v2154, %v2182
        %v2192 = vmul.f32 %v2157, %v2182
        %v2193 = vmul.f32 %v2160, %v2182
        %v2194 = vmul.f32 %v2163, %v2182
        %v2195 = vmul.f32 %v2166, %v2182
        %v2196 = vmul.f32 %v2169, %v2182
        %v2197 = vmul.f32 %v2172, %v2182
        %v2198 = vmul.f32 %v2175, %v2182
        %v2199 = vmul.f32 %v2178, %v2182
        %v2200 = vld [vmem:[%s11] sm:$0x1]
        %v2202 = vperm.slane %v2200, 0
        %v2204 = vadd.f32 %v2184, %v2202
        %v2205 = vadd.f32 %v2185, %v2202
        %v2206 = vadd.f32 %v2186, %v2202
        %v2207 = vadd.f32 %v2187, %v2202
        %v2208 = vadd.f32 %v2188, %v2202
        %v2209 = vadd.f32 %v2189, %v2202
        %v2210 = vadd.f32 %v2190, %v2202
        %v2211 = vadd.f32 %v2191, %v2202
        %v2212 = vadd.f32 %v2192, %v2202
        %v2213 = vadd.f32 %v2193, %v2202
        %v2214 = vadd.f32 %v2194, %v2202
        %v2215 = vadd.f32 %v2195, %v2202
        %v2216 = vadd.f32 %v2196, %v2202
        %v2217 = vadd.f32 %v2197, %v2202
        %v2218 = vadd.f32 %v2198, %v2202
        %v2219 = vadd.f32 %v2199, %v2202
        %v2220 = vld [vmem:[%s12] sm:$0xf]
        %v2222 = vsel %vm738, %v2220, 0
        %2224 = vmatpush.msra.mxu0 0.0
        %2225 = vmatpush.msra.mxu0 0.0
        %2226 = vmatpush.msra.mxu0 0.0
        %2227 = vmatpush.msra.mxu0 0.0
        %2228 = vmatpush.msra.mxu0 0.0
        %2229 = vmatpush.msra.mxu0 0.0
        %2230 = vmatpush.msra.mxu0 0.0
        %2231 = vmatpush.msra.mxu0 0.0
        %2232 = vmatpush.msra.mxu0 0.0
        %2233 = vmatpush.msra.mxu0 0.0
        %2234 = vmatpush.msra.mxu0 0.0
        %2235 = vmatpush.msra.mxu0 0.0
        %2236 = vmatpush.msra.mxu0 0.0
        %2237 = vmatpush.msra.mxu0 0.0
        %2238 = vmatpush.msra.mxu0 0.0
        %2239 = vmatpush.msra.mxu0 %v2222
        %2240 = vmatmul.f32.gmra.mxu0 %v691
        %v2241 = vpop.f32.mrf.mxu0
        %v2242 = vadd.f32 0.0, %v2241
        %2243 = vmatmul.f32.gmra.mxu0 %v694
        %v2244 = vpop.f32.mrf.mxu0
        %v2245 = vadd.f32 0.0, %v2244
        %2246 = vmatmul.f32.gmra.mxu0 %v697
        %v2247 = vpop.f32.mrf.mxu0
        %v2248 = vadd.f32 0.0, %v2247
        %2249 = vmatmul.f32.gmra.mxu0 %v700
        %v2250 = vpop.f32.mrf.mxu0
        %v2251 = vadd.f32 0.0, %v2250
        %2252 = vmatmul.f32.gmra.mxu0 %v703
        %v2253 = vpop.f32.mrf.mxu0
        %v2254 = vadd.f32 0.0, %v2253
        %2255 = vmatmul.f32.gmra.mxu0 %v706
        %v2256 = vpop.f32.mrf.mxu0
        %v2257 = vadd.f32 0.0, %v2256
        %2258 = vmatmul.f32.gmra.mxu0 %v709
        %v2259 = vpop.f32.mrf.mxu0
        %v2260 = vadd.f32 0.0, %v2259
        %2261 = vmatmul.f32.gmra.mxu0 %v712
        %v2262 = vpop.f32.mrf.mxu0
        %v2263 = vadd.f32 0.0, %v2262
        %2264 = vmatmul.f32.gmra.mxu0 %v715
        %v2265 = vpop.f32.mrf.mxu0
        %v2266 = vadd.f32 0.0, %v2265
        %2267 = vmatmul.f32.gmra.mxu0 %v718
        %v2268 = vpop.f32.mrf.mxu0
        %v2269 = vadd.f32 0.0, %v2268
        %2270 = vmatmul.f32.gmra.mxu0 %v721
        %v2271 = vpop.f32.mrf.mxu0
        %v2272 = vadd.f32 0.0, %v2271
        %2273 = vmatmul.f32.gmra.mxu0 %v724
        %v2274 = vpop.f32.mrf.mxu0
        %v2275 = vadd.f32 0.0, %v2274
        %2276 = vmatmul.f32.gmra.mxu0 %v727
        %v2277 = vpop.f32.mrf.mxu0
        %v2278 = vadd.f32 0.0, %v2277
        %2279 = vmatmul.f32.gmra.mxu0 %v730
        %v2280 = vpop.f32.mrf.mxu0
        %v2281 = vadd.f32 0.0, %v2280
        %2282 = vmatmul.f32.gmra.mxu0 %v733
        %v2283 = vpop.f32.mrf.mxu0
        %v2284 = vadd.f32 0.0, %v2283
        %2285 = vmatmul.f32.gmra.mxu0 %v736
        %v2286 = vpop.f32.mrf.mxu0
        %v2287 = vadd.f32 0.0, %v2286
        %2288 = vdwg.mxu0
        %v2289 = vld [vmem:[%s13] sm:$0x1]
        %v2291 = vperm.slane %v2289, 0
        %v2293 = vmul.f32 %v2242, %v2291
        %v2294 = vmul.f32 %v2245, %v2291
        %v2295 = vmul.f32 %v2248, %v2291
        %v2296 = vmul.f32 %v2251, %v2291
        %v2297 = vmul.f32 %v2254, %v2291
        %v2298 = vmul.f32 %v2257, %v2291
        %v2299 = vmul.f32 %v2260, %v2291
        %v2300 = vmul.f32 %v2263, %v2291
        %v2301 = vmul.f32 %v2266, %v2291
        %v2302 = vmul.f32 %v2269, %v2291
        %v2303 = vmul.f32 %v2272, %v2291
        %v2304 = vmul.f32 %v2275, %v2291
        %v2305 = vmul.f32 %v2278, %v2291
        %v2306 = vmul.f32 %v2281, %v2291
        %v2307 = vmul.f32 %v2284, %v2291
        %v2308 = vmul.f32 %v2287, %v2291
        %v2309 = vld [vmem:[%s14] sm:$0x1]
        %v2311 = vperm.slane %v2309, 0
        %v2313 = vadd.f32 %v2293, %v2311
        %v2314 = vadd.f32 %v2294, %v2311
        %v2315 = vadd.f32 %v2295, %v2311
        %v2316 = vadd.f32 %v2296, %v2311
        %v2317 = vadd.f32 %v2297, %v2311
        %v2318 = vadd.f32 %v2298, %v2311
        %v2319 = vadd.f32 %v2299, %v2311
        %v2320 = vadd.f32 %v2300, %v2311
        %v2321 = vadd.f32 %v2301, %v2311
        %v2322 = vadd.f32 %v2302, %v2311
        %v2323 = vadd.f32 %v2303, %v2311
        %v2324 = vadd.f32 %v2304, %v2311
        %v2325 = vadd.f32 %v2305, %v2311
        %v2326 = vadd.f32 %v2306, %v2311
        %v2327 = vadd.f32 %v2307, %v2311
        %v2328 = vadd.f32 %v2308, %v2311
        %v2329 = vadd.f32 %v2204, %v2313
        %v2330 = vadd.f32 %v2205, %v2314
        %v2331 = vadd.f32 %v2206, %v2315
        %v2332 = vadd.f32 %v2207, %v2316
        %v2333 = vadd.f32 %v2208, %v2317
        %v2334 = vadd.f32 %v2209, %v2318
        %v2335 = vadd.f32 %v2210, %v2319
        %v2336 = vadd.f32 %v2211, %v2320
        %v2337 = vadd.f32 %v2212, %v2321
        %v2338 = vadd.f32 %v2213, %v2322
        %v2339 = vadd.f32 %v2214, %v2323
        %v2340 = vadd.f32 %v2215, %v2324
        %v2341 = vadd.f32 %v2216, %v2325
        %v2342 = vadd.f32 %v2217, %v2326
        %v2343 = vadd.f32 %v2218, %v2327
        %v2344 = vadd.f32 %v2219, %v2328
        %v2345 = vmax.f32 %v2329, 0.0
        %v2346 = vmax.f32 %v2330, 0.0
        %v2347 = vmax.f32 %v2331, 0.0
        %v2348 = vmax.f32 %v2332, 0.0
        %v2349 = vmax.f32 %v2333, 0.0
        %v2350 = vmax.f32 %v2334, 0.0
        %v2351 = vmax.f32 %v2335, 0.0
        %v2352 = vmax.f32 %v2336, 0.0
        %v2353 = vmax.f32 %v2337, 0.0
        %v2354 = vmax.f32 %v2338, 0.0
        %v2355 = vmax.f32 %v2339, 0.0
        %v2356 = vmax.f32 %v2340, 0.0
        %v2357 = vmax.f32 %v2341, 0.0
        %v2358 = vmax.f32 %v2342, 0.0
        %v2359 = vmax.f32 %v2343, 0.0
        %v2360 = vmax.f32 %v2344, 0.0
        %vm2361 = vcmask 130048
        %2362 = vst.msk [vmem:[%s604] sm:$0xff] %vm2361, %v2345
        %2363 = vst.msk [vmem:[%s604 + $0x8] sm:$0xff] %vm2361, %v2346
        %2364 = vst.msk [vmem:[%s604 + $0x10] sm:$0xff] %vm2361, %v2347
        %2365 = vst.msk [vmem:[%s604 + $0x18] sm:$0xff] %vm2361, %v2348
        %2366 = vst.msk [vmem:[%s604 + $0x20] sm:$0xff] %vm2361, %v2349
        %2367 = vst.msk [vmem:[%s604 + $0x28] sm:$0xff] %vm2361, %v2350
        %2368 = vst.msk [vmem:[%s604 + $0x30] sm:$0xff] %vm2361, %v2351
        %2369 = vst.msk [vmem:[%s604 + $0x38] sm:$0xff] %vm2361, %v2352
        %2370 = vst.msk [vmem:[%s604 + $0x40] sm:$0xff] %vm2361, %v2353
        %2371 = vst.msk [vmem:[%s604 + $0x48] sm:$0xff] %vm2361, %v2354
        %2372 = vst.msk [vmem:[%s604 + $0x50] sm:$0xff] %vm2361, %v2355
        %2373 = vst.msk [vmem:[%s604 + $0x58] sm:$0xff] %vm2361, %v2356
        %2374 = vst.msk [vmem:[%s604 + $0x60] sm:$0xff] %vm2361, %v2357
        %2375 = vst.msk [vmem:[%s604 + $0x68] sm:$0xff] %vm2361, %v2358
        %2376 = vst.msk [vmem:[%s604 + $0x70] sm:$0xff] %vm2361, %v2359
        %2377 = vst.msk [vmem:[%s604 + $0x78] sm:$0xff] %vm2361, %v2360
        %s2378 = sand.u32 %s403, 1
        %s2379 = scalar_lea.sflag [#allocation4], %s2378
        %s2380 = sand.u32 %s403, 1
        %s2381 = smul.addr %s2380, 128
        %s2382 = scalar_lea.vmem [#allocation3], %s2381
        // Predicated region
        $region97: #{tpu_custom_call.1} parent=79 // pred_check
          %p2383 = pneg %p413
        $region98: #{tpu_custom_call.1} parent=79 // pred_check_branch
          %2385 = sbr.rel (%p2383) target = $region100
        $region99: #{tpu_custom_call.1} parent=79 // pred_region
          %s2386 = smul.u32 8, %s34
          %2388 = vsyncadd %s2379, 0
          %s2389 = smul.addr %s2386, 2
          %s2390 = smul.addr %s33, 32
          %s2391 = sadd.s32 %s2389, %s2390
          %s2392 = smul.addr %s2391, 8
          %s2393 = scalar_lea.hbm %s15, %s2392
          %s2394 = sshll.u32 %s2382, 4
          %s2395 = int_to_ptr.vmem [resolvable:$true] %s2394
          %s2396 = sshll.u32 %s2393, 4
          %s2397 = int_to_ptr.hbm [resolvable:$true] %s2396
          %2402 = dma.vmem_to_hbm [thread:$0]  %s2395, 2048, %s2397, %s2379, 128, 128, 8
        $region100: #{tpu_custom_call.1} parent=79 // pred_fallthru
          _
      $region80: #{tpu_custom_call.1} parent=5 // pred_fallthru
        _
      %p2403 = scmp.le.s32.totalorder 2, %s24
      // Predicated region
      $region101: #{tpu_custom_call.1} parent=5 // pred_check
        %p2404 = pneg %p2403
      $region102: #{tpu_custom_call.1} parent=5 // pred_check_branch
        %2406 = sbr.rel (%p2404) target = $region104
      $region103: #{tpu_custom_call.1} parent=5 // pred_region
        %s2407 = ssub.s32 %s24, 2
        // Predicated region
        $region105: #{tpu_custom_call.1} parent=103 // pred_check
          %p2408 = pneg %p419
        $region106: #{tpu_custom_call.1} parent=103 // pred_check_branch
          %2410 = sbr.rel (%p2408) target = $region108
        $region107: #{tpu_custom_call.1} parent=103 // pred_region
          %s2411 = sand.u32 %s404, 1
          %s2412 = scalar_lea.sflag [#allocation4], %s2411
          %s2413 = sand.u32 %s404, 1
          %s2414 = smul.addr %s2413, 128
          %s2415 = scalar_lea.vmem [#allocation3], %s2414
          %2417 = dma.done %s2412, 2048
        $region108: #{tpu_custom_call.1} parent=103 // pred_fallthru
          _
      $region104: #{tpu_custom_call.1} parent=5 // pred_fallthru
        _
    $region6: #{tpu_custom_call.1} parent=1 // loop_footer
      %s28 = sadd.s32 1, %s24
    $region7: #{tpu_custom_call.1} parent=1 // loop_footer_branch
      %23 = sbr.rel target = $region3
    $region8: #{tpu_custom_call.1} parent=1 // loop_exit
      _
    %2418 = vsyncpa [#allocation4], 1
    %s2419 = scalar_lea.sflag [#allocation4], 1
    %2420 = vsyncpa %s2419, 1

</llo_original>
